<compile_context>
chip_gen: v7x
topology: tpu7x:2x2x1
jax: 0.10.0
libtpu: 0.0.40
codegen_flags: <defaults>
</compile_context>

<pallas_src>
import math

import jax
import jax.numpy as jnp
from jax import lax
from jax.experimental import pallas as pl
from jax.experimental.pallas import tpu as pltpu

_F32_BYTES = 4
_VMEM_BUDGET = 40 * 1024 * 1024   # conservative: leaves headroom inside v7x's 64 MiB VMEM


# ---------------------------------------------------------------------------
# Kernel
# ---------------------------------------------------------------------------
def _make_kernel(num_layers, hidden_dim, output_dim):
    """Fused kernel: stacked GRU layers + Sigmoid(Linear) outcome head.

    Ref layout (time-major, PyTorch gate order (r, z, n), gates fused on the lane axis):
      x_ref:      [T, Bt, D]
      per layer:  wih3 [D_in, 3H], whh3 [H, 3H],
                  bgi3 [1, 3H]  (= b_ih + b_hh for r,z; b_ih for n),
                  bhn  [1, H]   (= b_hh_n, stays inside r * (h@W_hn + b_hn))
      head:       w_head [1, H] (O==1) or [H, O];  b_head [1, 1] or [1, O]
      y_ref:      [Bt, T] (O==1) or [Bt, T, O]
      scratch:    gi3 [T, Bt, 3H]; hseq [T, Bt, H] (only if needed); logits [T, Bt] (O==1)
    """
    H = hidden_dim
    fuse_head = (output_dim == 1)
    need_hseq = (num_layers > 1) or (not fuse_head)

    def kernel(*args):
        idx = 0
        x_ref = args[idx]; idx += 1
        layer_refs = []
        for _ in range(num_layers):
            layer_refs.append(args[idx:idx + 4]); idx += 4
        w_head_ref = args[idx]; idx += 1
        b_head_ref = args[idx]; idx += 1
        y_ref = args[idx]; idx += 1
        scr = list(args[idx:])
        si = 0
        gi3 = scr[si]; si += 1
        hseq = None
        if need_hseq:
            hseq = scr[si]; si += 1
        logit_scr = scr[si] if fuse_head else None

        T, Bt, _ = x_ref.shape

        def run_layer(src_ref, wih3_ref, whh3_ref, bgi3_ref, bhn_ref, is_last):
            Tn, Bn, D_in = src_ref.shape

            # ---- hoisted, gate-fused input projection: ONE [T*Bt, D]x[D, 3H] matmul ----
            # (Bn is a multiple of 8, so the reshape is a free view.)
            x2 = src_ref[...].reshape(Tn * Bn, D_in)
            gi3[...] = (jnp.dot(x2, wih3_ref[...], preferred_element_type=jnp.float32)
                        + bgi3_ref[...]).reshape(Tn, Bn, 3 * H)

            # ---- recurrence: a single [Bt, H]x[H, 3H] matmul per step, h kept in vregs ----
            whh3 = whh3_ref[...]                                     # loop-invariant load
            bhn_b = jnp.broadcast_to(bhn_ref[...], (Bn, H))          # hoisted broadcasts
            write_logits = is_last and fuse_head
            if write_logits:
                w_vec_b = jnp.broadcast_to(w_head_ref[...], (Bn, H))

            def step(t, h_prev):
                gh3 = jnp.dot(h_prev, whh3, preferred_element_type=jnp.float32)   # [Bn, 3H]
                gi = gi3[t]                                                       # [Bn, 3H]
                rz = jax.nn.sigmoid(gi[:, :2 * H] + gh3[:, :2 * H])               # exact
                r = rz[:, :H]
                z = rz[:, H:]
                n = jnp.tanh(gi[:, 2 * H:] + r * (gh3[:, 2 * H:] + bhn_b))
                h_new = n + z * (h_prev - n)              # == (1 - z) * n + z * h_prev
                if write_logits:
                    # fused outcome head (O==1): lane-reduce, off the h critical path
                    logit_row = jnp.sum(h_new * w_vec_b, axis=-1, keepdims=True).T  # [1, Bn]
                    logit_scr[pl.ds(t, 1), :] = logit_row
                else:
                    hseq[t] = h_new                       # dense leading-dim store
                return h_new

            h0 = jnp.zeros((Bn, H), jnp.float32)          # PyTorch default h0 = 0
            if Tn <= 32:
                unroll = True                             # full unroll: LLO can overlap steps
            else:
                unroll = next(u for u in (8, 4, 2, 1) if Tn % u == 0)
            lax.fori_loop(0, Tn, step, h0, unroll=unroll)

        # stacked GRU layers: layer 0 reads x, later layers read the previous hidden sequence
        run_layer(x_ref, *layer_refs[0], is_last=(num_layers == 1))
        for l in range(1, num_layers):
            run_layer(hseq, *layer_refs[l], is_last=(l == num_layers - 1))

        # ---- finalize head ----
        if fuse_head:
            # bias + exact sigmoid applied once; output [Bt, T] (T on lanes)
            y_ref[...] = jax.nn.sigmoid(jnp.transpose(logit_scr[...]) + b_head_ref[...])
        else:
            hs = hseq[...]                                            # [T, Bt, H]
            logits = (jnp.dot(hs.reshape(T * Bt, H), w_head_ref[...],
                              preferred_element_type=jnp.float32) + b_head_ref[...])
            y = jax.nn.sigmoid(logits).reshape(T, Bt, output_dim)
            y_ref[...] = jnp.transpose(y, (1, 0, 2))                  # [Bt, T, O]

    return kernel


# ---------------------------------------------------------------------------
# Wrapper helpers
# ---------------------------------------------------------------------------
def _layer_in_dims(input_dim, hidden_dim, num_layers):
    return [input_dim if l == 0 else hidden_dim for l in range(num_layers)]


def _vmem_footprint(T, bt, D, H, O, num_layers, need_hseq, fuse_head):
    scratch = T * bt * 3 * H                              # gi3
    if need_hseq:
        scratch += T * bt * H                             # inter-layer hidden sequence
    if fuse_head:
        scratch += T * max(bt, 8)                         # logits [T, Bt]
    io = 2 * T * bt * D + 2 * bt * T * (1 if fuse_head else O)   # double-buffered x / y blocks
    w = 0
    for d_in in _layer_in_dims(D, H, num_layers):
        w += d_in * 3 * H + H * 3 * H + 3 * H + H
    w += H * O + O
    w *= 2                                                # replicated blocks still double-buffered
    return (scratch + io + w) * _F32_BYTES


def _pick_batch_tile(B_pad, T, D, H, O, num_layers, need_hseq, fuse_head):
    """Largest batch tile (multiple of 8, divides B_pad) fitting the VMEM budget.

    When B_pad >= 16 the tile is capped at B_pad // 2 so the 'parallel' grid axis has
    at least two steps (v7x 2-TC sharding); the extra grid step costs ~0.35us on 1-TC chips.
    """
    cap = min(128, B_pad if B_pad < 16 else max(8, B_pad // 2))
    bt = cap - (cap % 8)
    while bt >= 8:
        if B_pad % bt == 0 and _vmem_footprint(
                T, bt, D, H, O, num_layers, need_hseq, fuse_head) <= _VMEM_BUDGET:
            return bt
        bt -= 8
    return 8   # TODO(synk): T-chunk the gate scratch if even bt=8 exceeds the budget


def _pack_params(params):
    """Convert PyTorch-layout GRU/Linear params to the kernel's gate-fused layout."""
    layers = []
    for (w_ih, w_hh, b_ih, b_hh) in params["gru_layers"]:
        H = w_hh.shape[1]
        wih3 = jnp.transpose(w_ih)                        # [D_in, 3H], columns (r|z|n)
        whh3 = jnp.transpose(w_hh)                        # [H, 3H]
        # fold b_ih + b_hh for r,z into the hoisted input projection; keep b_hh_n separate
        bgi3 = jnp.concatenate(
            [b_ih[:2 * H] + b_hh[:2 * H], b_ih[2 * H:]]).reshape(1, 3 * H)
        bhn = b_hh[2 * H:].reshape(1, H)
        layers.append((wih3, whh3, bgi3, bhn))
    w_head = params["w_head"]                             # [O, H] (PyTorch nn.Linear layout)
    b_head = params["b_head"]                             # [O]
    O, H = w_head.shape
    if O == 1:
        w_head_k = w_head.reshape(1, H)
        b_head_k = b_head.reshape(1, 1)
    else:
        w_head_k = jnp.transpose(w_head)                  # [H, O]
        b_head_k = b_head.reshape(1, O)
    return layers, w_head_k, b_head_k


def _fused_gru_outcome(xt, layers, w_head, b_head, output_dim, input_dim, hidden_dim):
    T, B_pad, D = xt.shape
    num_layers = len(layers)
    H = hidden_dim
    O = output_dim
    fuse_head = (O == 1)
    need_hseq = (num_layers > 1) or (not fuse_head)

    bt = _pick_batch_tile(B_pad, T, D, H, O, num_layers, need_hseq, fuse_head)
    grid = (B_pad // bt,)

    def rep(a):
        nd = a.ndim
        # TODO(synk): pipeline_mode=pl.Buffered(1) would single-buffer these replicated
        #             weights (worthwhile at H>=256 / on v7x); kept default for robustness.
        return pl.BlockSpec(a.shape, lambda b: (0,) * nd)

    in_specs = [pl.BlockSpec((T, bt, D), lambda b: (0, b, 0))]
    inputs = [xt]
    for layer in layers:
        for a in layer:
            in_specs.append(rep(a))
            inputs.append(a)
    in_specs += [rep(w_head), rep(b_head)]
    inputs += [w_head, b_head]

    if fuse_head:
        out_shape = jax.ShapeDtypeStruct((B_pad, T), jnp.float32)
        out_spec = pl.BlockSpec((bt, T), lambda b: (b, 0))
    else:
        out_shape = jax.ShapeDtypeStruct((B_pad, T, O), jnp.float32)
        out_spec = pl.BlockSpec((bt, T, O), lambda b: (b, 0, 0))

    scratch = [pltpu.VMEM((T, bt, 3 * H), jnp.float32)]   # hoisted gate-fused input projection
    if need_hseq:
        scratch.append(pltpu.VMEM((T, bt, H), jnp.float32))   # inter-layer hidden sequence
    if fuse_head:
        scratch.append(pltpu.VMEM((T, bt), jnp.float32))      # per-step head logits

    footprint = _vmem_footprint(T, bt, D, H, O, num_layers, need_hseq, fuse_head)
    vmem_limit = int(min(64 << 20, max(32 << 20, footprint + (12 << 20))))

    return pl.pallas_call(
        _make_kernel(num_layers, H, O),
        out_shape=out_shape,
        grid=grid,
        in_specs=in_specs,
        out_specs=out_spec,
        scratch_shapes=scratch,
        compiler_params=pltpu.CompilerParams(
            dimension_semantics=("parallel",),
            vmem_limit_bytes=vmem_limit,
        ),
    )(*inputs)


@jax.jit
def dl_model_forward(x, lens, params):
    """Forward pass of DLModel(backbone='gru', task='outcome'). x: [B, T, D] batch-first."""
    del lens  # the GRU backbone ignores the sequence-length mask (reference behavior)
    layers, w_head, b_head = _pack_params(params)
    O = params["w_head"].shape[0]
    H = params["gru_layers"][0][1].shape[1]
    D = params["gru_layers"][0][0].shape[1]
    B, T, _ = x.shape

    xt = jnp.transpose(x, (1, 0, 2))                      # time-major [T, B, D]
    B_pad = ((B + 7) // 8) * 8                            # sublane-aligned batch (free views)
    if B_pad != B:
        xt = jnp.pad(xt, ((0, 0), (0, B_pad - B), (0, 0)))

    y = _fused_gru_outcome(xt, layers, w_head, b_head, O, D, H)   # [B_pad, T] (or [B_pad, T, O])
    y = y[:B]
    return jnp.squeeze(y)                                 # matches the PyTorch `.squeeze()`


# ---------------------------------------------------------------------------
# Deterministic parameter initialization (PyTorch layout, U(-1/sqrt(H), 1/sqrt(H)))
# ---------------------------------------------------------------------------
def init_params(key, input_dim, hidden_dim, output_dim, num_layers):
    k = 1.0 / math.sqrt(hidden_dim)
    layers = []
    for layer in range(num_layers):
        d_in = input_dim if layer == 0 else hidden_dim
        key, k1, k2, k3, k4 = jax.random.split(key, 5)
        w_ih = jax.random.uniform(k1, (3 * hidden_dim, d_in), jnp.float32, -k, k)   # (r|z|n)
        w_hh = jax.random.uniform(k2, (3 * hidden_dim, hidden_dim), jnp.float32, -k, k)
        b_ih = jax.random.uniform(k3, (3 * hidden_dim,), jnp.float32, -k, k)
        b_hh = jax.random.uniform(k4, (3 * hidden_dim,), jnp.float32, -k, k)
        layers.append((w_ih, w_hh, b_ih, b_hh))
    key, k5, k6 = jax.random.split(key, 3)
    w_head = jax.random.uniform(k5, (output_dim, hidden_dim), jnp.float32, -k, k)
    b_head = jax.random.uniform(k6, (output_dim,), jnp.float32, -k, k)
    return {"gru_layers": layers, "w_head": w_head, "b_head": b_head}


# ---------------------------------------------------------------------------
# Pure-JAX reference (for correctness check)
# ---------------------------------------------------------------------------
def _reference_forward(x, params):
    hp = jax.lax.Precision.HIGHEST
    h_seq = x
    for (w_ih, w_hh, b_ih, b_hh) in params["gru_layers"]:
        H = w_hh.shape[1]

        def cell(h, xt):
            gi = jnp.dot(xt, w_ih.T, precision=hp) + b_ih
            gh = jnp.dot(h, w_hh.T, precision=hp) + b_hh
            r = jax.nn.sigmoid(gi[:, :H] + gh[:, :H])
            z = jax.nn.sigmoid(gi[:, H:2 * H] + gh[:, H:2 * H])
            n = jnp.tanh(gi[:, 2 * H:] + r * gh[:, 2 * H:])
            h_new = (1.0 - z) * n + z * h
            return h_new, h_new

        h0 = jnp.zeros((x.shape[0], H), x.dtype)
        _, hs = lax.scan(cell, h0, jnp.transpose(h_seq, (1, 0, 2)))
        h_seq = jnp.transpose(hs, (1, 0, 2))
    logits = jnp.dot(h_seq, params["w_head"].T, precision=hp) + params["b_head"]
    return jnp.squeeze(jax.nn.sigmoid(logits))


# ---------------------------------------------------------------------------
# Main
# ---------------------------------------------------------------------------
if __name__ == "__main__":
    B, T = 2, 8
    input_dim, hidden_dim, output_dim, num_layers = 32, 32, 1, 1

    key = jax.random.PRNGKey(0)
    key, xk = jax.random.split(key)
    x = jax.random.normal(xk, (B, T, input_dim), jnp.float32)
    lens = jnp.array([T, 5], jnp.int32)   # unused by the GRU backbone (mask ignored)

    params = init_params(jax.random.PRNGKey(42), input_dim, hidden_dim, output_dim, num_layers)

    y_hat = dl_model_forward(x, lens, params)
    jax.block_until_ready(y_hat)

    assert y_hat.shape == (B, T), y_hat.shape
    assert bool(jnp.all(jnp.isfinite(y_hat)))
    assert bool(jnp.all((y_hat >= 0.0) & (y_hat <= 1.0)))   # sigmoid output

    y_ref = _reference_forward(x, params)
    max_err = float(jnp.max(jnp.abs(y_hat - y_ref)))
    assert max_err < 2e-2, max_err

    print("KERNEL_OK")
</pallas_src>

<mosaic_0001>
module attributes {stable_mosaic.version = 11 : i64} {
  func.func @kernel(%arg0: i32, %arg1: memref<8x8x32xf32, #tpu.memory_space<vmem>>, %arg2: memref<32x96xf32, #tpu.memory_space<vmem>>, %arg3: memref<32x96xf32, #tpu.memory_space<vmem>>, %arg4: memref<1x96xf32, #tpu.memory_space<vmem>>, %arg5: memref<1x32xf32, #tpu.memory_space<vmem>>, %arg6: memref<1x32xf32, #tpu.memory_space<vmem>>, %arg7: memref<1x1xf32, #tpu.memory_space<vmem>>, %arg8: memref<8x8xf32, #tpu.memory_space<vmem>>, %arg9: memref<8x8x96xf32, #tpu.memory_space<vmem>>, %arg10: memref<8x8xf32, #tpu.memory_space<vmem>>) attributes {dimension_semantics = [#tpu.dimension_semantics<parallel>], iteration_bounds = array<i64: 1>, scalar_prefetch = 0 : i64, scratch_operands = 2 : i64, tpu.core_type = #tpu.core_type<tc>, window_params = [{transform_indices = @transform_0, window_bounds = array<i64: 8, 8, 32>}, {pipeline_mode = #tpu.pipeline_mode<synchronous>, transform_indices = @transform_1, window_bounds = array<i64: 32, 96>}, {pipeline_mode = #tpu.pipeline_mode<synchronous>, transform_indices = @transform_2, window_bounds = array<i64: 32, 96>}, {pipeline_mode = #tpu.pipeline_mode<synchronous>, transform_indices = @transform_3, window_bounds = array<i64: 1, 96>}, {pipeline_mode = #tpu.pipeline_mode<synchronous>, transform_indices = @transform_4, window_bounds = array<i64: 1, 32>}, {pipeline_mode = #tpu.pipeline_mode<synchronous>, transform_indices = @transform_5, window_bounds = array<i64: 1, 32>}, {pipeline_mode = #tpu.pipeline_mode<synchronous>, transform_indices = @transform_6, window_bounds = array<i64: 1, 1>}, {transform_indices = @transform_7, window_bounds = array<i64: 8, 8>}]} {
    %c0 = arith.constant 0 : index
    %c0_0 = arith.constant 0 : index
    %c0_1 = arith.constant 0 : index
    %0 = vector.load %arg1[%c0, %c0_0, %c0_1] : memref<8x8x32xf32, #tpu.memory_space<vmem>>, vector<8x8x32xf32>
    %1 = vector.shape_cast %0 : vector<8x8x32xf32> to vector<64x32xf32>
    %c0_2 = arith.constant 0 : index
    %c0_3 = arith.constant 0 : index
    %2 = vector.load %arg2[%c0_2, %c0_3] : memref<32x96xf32, #tpu.memory_space<vmem>>, vector<32x96xf32>
    %cst = arith.constant dense<0.000000e+00> : vector<64x96xf32>
    %3 = tpu.matmul %1, %2, %cst {dimension_numbers = #tpu.dot_dimension_numbers<[1], [0], [0], [1], [0, 0, 1, 1], [], []>} : vector<64x32xf32>, vector<32x96xf32>, vector<64x96xf32> -> vector<64x96xf32>
    %c0_4 = arith.constant 0 : index
    %c0_5 = arith.constant 0 : index
    %4 = vector.load %arg4[%c0_4, %c0_5] : memref<1x96xf32, #tpu.memory_space<vmem>>, vector<1x96xf32>
    %5 = vector.broadcast %4 : vector<1x96xf32> to vector<64x96xf32>
    %6 = arith.addf %3, %5 : vector<64x96xf32>
    %7 = vector.shape_cast %6 : vector<64x96xf32> to vector<8x8x96xf32>
    %c0_6 = arith.constant 0 : index
    %c0_7 = arith.constant 0 : index
    %c0_8 = arith.constant 0 : index
    %8 = vector.load %arg9[%c0_6, %c0_7, %c0_8] : memref<8x8x96xf32, #tpu.memory_space<vmem>>, vector<8x8x96xf32>
    tpu.vector_store %arg9[%c0_6, %c0_7, %c0_8], %7 {strides = array<i32>} : memref<8x8x96xf32, #tpu.memory_space<vmem>>, vector<8x8x96xf32>,
    %c0_9 = arith.constant 0 : index
    %c0_10 = arith.constant 0 : index
    %9 = vector.load %arg3[%c0_9, %c0_10] : memref<32x96xf32, #tpu.memory_space<vmem>>, vector<32x96xf32>
    %c0_11 = arith.constant 0 : index
    %c0_12 = arith.constant 0 : index
    %10 = vector.load %arg5[%c0_11, %c0_12] : memref<1x32xf32, #tpu.memory_space<vmem>>, vector<1x32xf32>
    %11 = vector.shape_cast %10 : vector<1x32xf32> to vector<1x32xf32>
    %12 = vector.broadcast %11 : vector<1x32xf32> to vector<8x32xf32>
    %c0_13 = arith.constant 0 : index
    %c0_14 = arith.constant 0 : index
    %13 = vector.load %arg6[%c0_13, %c0_14] : memref<1x32xf32, #tpu.memory_space<vmem>>, vector<1x32xf32>
    %14 = vector.shape_cast %13 : vector<1x32xf32> to vector<1x32xf32>
    %15 = vector.broadcast %14 : vector<1x32xf32> to vector<8x32xf32>
    %cst_15 = arith.constant 0.000000e+00 : f32
    %16 = vector.broadcast %cst_15 : f32 to vector<8x32xf32>
    %c0_i32 = arith.constant 0 : i32
    %cst_16 = arith.constant dense<0.000000e+00> : vector<8x96xf32>
    %17 = tpu.matmul %16, %9, %cst_16 {dimension_numbers = #tpu.dot_dimension_numbers<[1], [0], [0], [1], [0, 0, 1, 1], [], []>} : vector<8x32xf32>, vector<32x96xf32>, vector<8x96xf32> -> vector<8x96xf32>
    %18 = arith.index_cast %c0_i32 : i32 to index
    %c0_17 = arith.constant 0 : index
    %c0_18 = arith.constant 0 : index
    %19 = vector.load %arg9[%18, %c0_17, %c0_18] : memref<8x8x96xf32, #tpu.memory_space<vmem>>, vector<1x8x96xf32>
    %20 = vector.shape_cast %19 : vector<1x8x96xf32> to vector<8x96xf32>
    %21 = vector.extract_strided_slice %20 {offsets = [0, 0], sizes = [8, 64], strides = [1, 1]} : vector<8x96xf32> to vector<8x64xf32>
    %22 = vector.extract_strided_slice %17 {offsets = [0, 0], sizes = [8, 64], strides = [1, 1]} : vector<8x96xf32> to vector<8x64xf32>
    %23 = arith.addf %21, %22 : vector<8x64xf32>
    %24 = arith.negf %23 : vector<8x64xf32>
    %25 = math.exp %24 : vector<8x64xf32>
    %cst_19 = arith.constant 1.000000e+00 : f32
    %26 = vector.broadcast %cst_19 : f32 to vector<8x64xf32>
    %27 = arith.addf %26, %25 : vector<8x64xf32>
    %28 = arith.divf %26, %27 : vector<8x64xf32>
    %29 = vector.extract_strided_slice %28 {offsets = [0, 0], sizes = [8, 32], strides = [1, 1]} : vector<8x64xf32> to vector<8x32xf32>
    %30 = vector.extract_strided_slice %28 {offsets = [0, 32], sizes = [8, 32], strides = [1, 1]} : vector<8x64xf32> to vector<8x32xf32>
    %31 = vector.extract_strided_slice %20 {offsets = [0, 64], sizes = [8, 32], strides = [1, 1]} : vector<8x96xf32> to vector<8x32xf32>
    %32 = vector.extract_strided_slice %17 {offsets = [0, 64], sizes = [8, 32], strides = [1, 1]} : vector<8x96xf32> to vector<8x32xf32>
    %33 = arith.addf %32, %12 : vector<8x32xf32>
    %34 = arith.mulf %29, %33 : vector<8x32xf32>
    %35 = arith.addf %31, %34 : vector<8x32xf32>
    %36 = math.tanh %35 : vector<8x32xf32>
    %37 = arith.subf %16, %36 : vector<8x32xf32>
    %38 = arith.mulf %30, %37 : vector<8x32xf32>
    %39 = arith.addf %36, %38 : vector<8x32xf32>
    %40 = arith.mulf %39, %15 : vector<8x32xf32>
    %cst_20 = arith.constant dense<0.000000e+00> : vector<8xf32>
    %41 = vector.multi_reduction <add>, %40, %cst_20 [1] : vector<8x32xf32> to vector<8xf32>
    %42 = vector.shape_cast %41 : vector<8xf32> to vector<8x1xf32>
    %43 = tpu.transpose %42, [1, 0] : vector<8x1xf32> -> vector<1x8xf32>
    %44 = arith.index_cast %c0_i32 : i32 to index
    %c0_21 = arith.constant 0 : index
    %45 = vector.load %arg10[%44, %c0_21] : memref<8x8xf32, #tpu.memory_space<vmem>>, vector<1x8xf32>
    tpu.vector_store %arg10[%44, %c0_21], %43 {strides = array<i32>} : memref<8x8xf32, #tpu.memory_space<vmem>>, vector<1x8xf32>,
    %c1_i32 = arith.constant 1 : i32
    %cst_22 = arith.constant dense<0.000000e+00> : vector<8x96xf32>
    %46 = tpu.matmul %39, %9, %cst_22 {dimension_numbers = #tpu.dot_dimension_numbers<[1], [0], [0], [1], [0, 0, 1, 1], [], []>} : vector<8x32xf32>, vector<32x96xf32>, vector<8x96xf32> -> vector<8x96xf32>
    %47 = arith.index_cast %c1_i32 : i32 to index
    %c0_23 = arith.constant 0 : index
    %c0_24 = arith.constant 0 : index
    %48 = vector.load %arg9[%47, %c0_23, %c0_24] : memref<8x8x96xf32, #tpu.memory_space<vmem>>, vector<1x8x96xf32>
    %49 = vector.shape_cast %48 : vector<1x8x96xf32> to vector<8x96xf32>
    %50 = vector.extract_strided_slice %49 {offsets = [0, 0], sizes = [8, 64], strides = [1, 1]} : vector<8x96xf32> to vector<8x64xf32>
    %51 = vector.extract_strided_slice %46 {offsets = [0, 0], sizes = [8, 64], strides = [1, 1]} : vector<8x96xf32> to vector<8x64xf32>
    %52 = arith.addf %50, %51 : vector<8x64xf32>
    %53 = arith.negf %52 : vector<8x64xf32>
    %54 = math.exp %53 : vector<8x64xf32>
    %cst_25 = arith.constant 1.000000e+00 : f32
    %55 = vector.broadcast %cst_25 : f32 to vector<8x64xf32>
    %56 = arith.addf %55, %54 : vector<8x64xf32>
    %57 = arith.divf %55, %56 : vector<8x64xf32>
    %58 = vector.extract_strided_slice %57 {offsets = [0, 0], sizes = [8, 32], strides = [1, 1]} : vector<8x64xf32> to vector<8x32xf32>
    %59 = vector.extract_strided_slice %57 {offsets = [0, 32], sizes = [8, 32], strides = [1, 1]} : vector<8x64xf32> to vector<8x32xf32>
    %60 = vector.extract_strided_slice %49 {offsets = [0, 64], sizes = [8, 32], strides = [1, 1]} : vector<8x96xf32> to vector<8x32xf32>
    %61 = vector.extract_strided_slice %46 {offsets = [0, 64], sizes = [8, 32], strides = [1, 1]} : vector<8x96xf32> to vector<8x32xf32>
    %62 = arith.addf %61, %12 : vector<8x32xf32>
    %63 = arith.mulf %58, %62 : vector<8x32xf32>
    %64 = arith.addf %60, %63 : vector<8x32xf32>
    %65 = math.tanh %64 : vector<8x32xf32>
    %66 = arith.subf %39, %65 : vector<8x32xf32>
    %67 = arith.mulf %59, %66 : vector<8x32xf32>
    %68 = arith.addf %65, %67 : vector<8x32xf32>
    %69 = arith.mulf %68, %15 : vector<8x32xf32>
    %cst_26 = arith.constant dense<0.000000e+00> : vector<8xf32>
    %70 = vector.multi_reduction <add>, %69, %cst_26 [1] : vector<8x32xf32> to vector<8xf32>
    %71 = vector.shape_cast %70 : vector<8xf32> to vector<8x1xf32>
    %72 = tpu.transpose %71, [1, 0] : vector<8x1xf32> -> vector<1x8xf32>
    %73 = arith.index_cast %c1_i32 : i32 to index
    %c0_27 = arith.constant 0 : index
    %74 = vector.load %arg10[%73, %c0_27] : memref<8x8xf32, #tpu.memory_space<vmem>>, vector<1x8xf32>
    tpu.vector_store %arg10[%73, %c0_27], %72 {strides = array<i32>} : memref<8x8xf32, #tpu.memory_space<vmem>>, vector<1x8xf32>,
    %c2_i32 = arith.constant 2 : i32
    %cst_28 = arith.constant dense<0.000000e+00> : vector<8x96xf32>
    %75 = tpu.matmul %68, %9, %cst_28 {dimension_numbers = #tpu.dot_dimension_numbers<[1], [0], [0], [1], [0, 0, 1, 1], [], []>} : vector<8x32xf32>, vector<32x96xf32>, vector<8x96xf32> -> vector<8x96xf32>
    %76 = arith.index_cast %c2_i32 : i32 to index
    %c0_29 = arith.constant 0 : index
    %c0_30 = arith.constant 0 : index
    %77 = vector.load %arg9[%76, %c0_29, %c0_30] : memref<8x8x96xf32, #tpu.memory_space<vmem>>, vector<1x8x96xf32>
    %78 = vector.shape_cast %77 : vector<1x8x96xf32> to vector<8x96xf32>
    %79 = vector.extract_strided_slice %78 {offsets = [0, 0], sizes = [8, 64], strides = [1, 1]} : vector<8x96xf32> to vector<8x64xf32>
    %80 = vector.extract_strided_slice %75 {offsets = [0, 0], sizes = [8, 64], strides = [1, 1]} : vector<8x96xf32> to vector<8x64xf32>
    %81 = arith.addf %79, %80 : vector<8x64xf32>
    %82 = arith.negf %81 : vector<8x64xf32>
    %83 = math.exp %82 : vector<8x64xf32>
    %cst_31 = arith.constant 1.000000e+00 : f32
    %84 = vector.broadcast %cst_31 : f32 to vector<8x64xf32>
    %85 = arith.addf %84, %83 : vector<8x64xf32>
    %86 = arith.divf %84, %85 : vector<8x64xf32>
    %87 = vector.extract_strided_slice %86 {offsets = [0, 0], sizes = [8, 32], strides = [1, 1]} : vector<8x64xf32> to vector<8x32xf32>
    %88 = vector.extract_strided_slice %86 {offsets = [0, 32], sizes = [8, 32], strides = [1, 1]} : vector<8x64xf32> to vector<8x32xf32>
    %89 = vector.extract_strided_slice %78 {offsets = [0, 64], sizes = [8, 32], strides = [1, 1]} : vector<8x96xf32> to vector<8x32xf32>
    %90 = vector.extract_strided_slice %75 {offsets = [0, 64], sizes = [8, 32], strides = [1, 1]} : vector<8x96xf32> to vector<8x32xf32>
    %91 = arith.addf %90, %12 : vector<8x32xf32>
    %92 = arith.mulf %87, %91 : vector<8x32xf32>
    %93 = arith.addf %89, %92 : vector<8x32xf32>
    %94 = math.tanh %93 : vector<8x32xf32>
    %95 = arith.subf %68, %94 : vector<8x32xf32>
    %96 = arith.mulf %88, %95 : vector<8x32xf32>
    %97 = arith.addf %94, %96 : vector<8x32xf32>
    %98 = arith.mulf %97, %15 : vector<8x32xf32>
    %cst_32 = arith.constant dense<0.000000e+00> : vector<8xf32>
    %99 = vector.multi_reduction <add>, %98, %cst_32 [1] : vector<8x32xf32> to vector<8xf32>
    %100 = vector.shape_cast %99 : vector<8xf32> to vector<8x1xf32>
    %101 = tpu.transpose %100, [1, 0] : vector<8x1xf32> -> vector<1x8xf32>
    %102 = arith.index_cast %c2_i32 : i32 to index
    %c0_33 = arith.constant 0 : index
    %103 = vector.load %arg10[%102, %c0_33] : memref<8x8xf32, #tpu.memory_space<vmem>>, vector<1x8xf32>
    tpu.vector_store %arg10[%102, %c0_33], %101 {strides = array<i32>} : memref<8x8xf32, #tpu.memory_space<vmem>>, vector<1x8xf32>,
    %c3_i32 = arith.constant 3 : i32
    %cst_34 = arith.constant dense<0.000000e+00> : vector<8x96xf32>
    %104 = tpu.matmul %97, %9, %cst_34 {dimension_numbers = #tpu.dot_dimension_numbers<[1], [0], [0], [1], [0, 0, 1, 1], [], []>} : vector<8x32xf32>, vector<32x96xf32>, vector<8x96xf32> -> vector<8x96xf32>
    %105 = arith.index_cast %c3_i32 : i32 to index
    %c0_35 = arith.constant 0 : index
    %c0_36 = arith.constant 0 : index
    %106 = vector.load %arg9[%105, %c0_35, %c0_36] : memref<8x8x96xf32, #tpu.memory_space<vmem>>, vector<1x8x96xf32>
    %107 = vector.shape_cast %106 : vector<1x8x96xf32> to vector<8x96xf32>
    %108 = vector.extract_strided_slice %107 {offsets = [0, 0], sizes = [8, 64], strides = [1, 1]} : vector<8x96xf32> to vector<8x64xf32>
    %109 = vector.extract_strided_slice %104 {offsets = [0, 0], sizes = [8, 64], strides = [1, 1]} : vector<8x96xf32> to vector<8x64xf32>
    %110 = arith.addf %108, %109 : vector<8x64xf32>
    %111 = arith.negf %110 : vector<8x64xf32>
    %112 = math.exp %111 : vector<8x64xf32>
    %cst_37 = arith.constant 1.000000e+00 : f32
    %113 = vector.broadcast %cst_37 : f32 to vector<8x64xf32>
    %114 = arith.addf %113, %112 : vector<8x64xf32>
    %115 = arith.divf %113, %114 : vector<8x64xf32>
    %116 = vector.extract_strided_slice %115 {offsets = [0, 0], sizes = [8, 32], strides = [1, 1]} : vector<8x64xf32> to vector<8x32xf32>
    %117 = vector.extract_strided_slice %115 {offsets = [0, 32], sizes = [8, 32], strides = [1, 1]} : vector<8x64xf32> to vector<8x32xf32>
    %118 = vector.extract_strided_slice %107 {offsets = [0, 64], sizes = [8, 32], strides = [1, 1]} : vector<8x96xf32> to vector<8x32xf32>
    %119 = vector.extract_strided_slice %104 {offsets = [0, 64], sizes = [8, 32], strides = [1, 1]} : vector<8x96xf32> to vector<8x32xf32>
    %120 = arith.addf %119, %12 : vector<8x32xf32>
    %121 = arith.mulf %116, %120 : vector<8x32xf32>
    %122 = arith.addf %118, %121 : vector<8x32xf32>
    %123 = math.tanh %122 : vector<8x32xf32>
    %124 = arith.subf %97, %123 : vector<8x32xf32>
    %125 = arith.mulf %117, %124 : vector<8x32xf32>
    %126 = arith.addf %123, %125 : vector<8x32xf32>
    %127 = arith.mulf %126, %15 : vector<8x32xf32>
    %cst_38 = arith.constant dense<0.000000e+00> : vector<8xf32>
    %128 = vector.multi_reduction <add>, %127, %cst_38 [1] : vector<8x32xf32> to vector<8xf32>
    %129 = vector.shape_cast %128 : vector<8xf32> to vector<8x1xf32>
    %130 = tpu.transpose %129, [1, 0] : vector<8x1xf32> -> vector<1x8xf32>
    %131 = arith.index_cast %c3_i32 : i32 to index
    %c0_39 = arith.constant 0 : index
    %132 = vector.load %arg10[%131, %c0_39] : memref<8x8xf32, #tpu.memory_space<vmem>>, vector<1x8xf32>
    tpu.vector_store %arg10[%131, %c0_39], %130 {strides = array<i32>} : memref<8x8xf32, #tpu.memory_space<vmem>>, vector<1x8xf32>,
    %c4_i32 = arith.constant 4 : i32
    %cst_40 = arith.constant dense<0.000000e+00> : vector<8x96xf32>
    %133 = tpu.matmul %126, %9, %cst_40 {dimension_numbers = #tpu.dot_dimension_numbers<[1], [0], [0], [1], [0, 0, 1, 1], [], []>} : vector<8x32xf32>, vector<32x96xf32>, vector<8x96xf32> -> vector<8x96xf32>
    %134 = arith.index_cast %c4_i32 : i32 to index
    %c0_41 = arith.constant 0 : index
    %c0_42 = arith.constant 0 : index
    %135 = vector.load %arg9[%134, %c0_41, %c0_42] : memref<8x8x96xf32, #tpu.memory_space<vmem>>, vector<1x8x96xf32>
    %136 = vector.shape_cast %135 : vector<1x8x96xf32> to vector<8x96xf32>
    %137 = vector.extract_strided_slice %136 {offsets = [0, 0], sizes = [8, 64], strides = [1, 1]} : vector<8x96xf32> to vector<8x64xf32>
    %138 = vector.extract_strided_slice %133 {offsets = [0, 0], sizes = [8, 64], strides = [1, 1]} : vector<8x96xf32> to vector<8x64xf32>
    %139 = arith.addf %137, %138 : vector<8x64xf32>
    %140 = arith.negf %139 : vector<8x64xf32>
    %141 = math.exp %140 : vector<8x64xf32>
    %cst_43 = arith.constant 1.000000e+00 : f32
    %142 = vector.broadcast %cst_43 : f32 to vector<8x64xf32>
    %143 = arith.addf %142, %141 : vector<8x64xf32>
    %144 = arith.divf %142, %143 : vector<8x64xf32>
    %145 = vector.extract_strided_slice %144 {offsets = [0, 0], sizes = [8, 32], strides = [1, 1]} : vector<8x64xf32> to vector<8x32xf32>
    %146 = vector.extract_strided_slice %144 {offsets = [0, 32], sizes = [8, 32], strides = [1, 1]} : vector<8x64xf32> to vector<8x32xf32>
    %147 = vector.extract_strided_slice %136 {offsets = [0, 64], sizes = [8, 32], strides = [1, 1]} : vector<8x96xf32> to vector<8x32xf32>
    %148 = vector.extract_strided_slice %133 {offsets = [0, 64], sizes = [8, 32], strides = [1, 1]} : vector<8x96xf32> to vector<8x32xf32>
    %149 = arith.addf %148, %12 : vector<8x32xf32>
    %150 = arith.mulf %145, %149 : vector<8x32xf32>
    %151 = arith.addf %147, %150 : vector<8x32xf32>
    %152 = math.tanh %151 : vector<8x32xf32>
    %153 = arith.subf %126, %152 : vector<8x32xf32>
    %154 = arith.mulf %146, %153 : vector<8x32xf32>
    %155 = arith.addf %152, %154 : vector<8x32xf32>
    %156 = arith.mulf %155, %15 : vector<8x32xf32>
    %cst_44 = arith.constant dense<0.000000e+00> : vector<8xf32>
    %157 = vector.multi_reduction <add>, %156, %cst_44 [1] : vector<8x32xf32> to vector<8xf32>
    %158 = vector.shape_cast %157 : vector<8xf32> to vector<8x1xf32>
    %159 = tpu.transpose %158, [1, 0] : vector<8x1xf32> -> vector<1x8xf32>
    %160 = arith.index_cast %c4_i32 : i32 to index
    %c0_45 = arith.constant 0 : index
    %161 = vector.load %arg10[%160, %c0_45] : memref<8x8xf32, #tpu.memory_space<vmem>>, vector<1x8xf32>
    tpu.vector_store %arg10[%160, %c0_45], %159 {strides = array<i32>} : memref<8x8xf32, #tpu.memory_space<vmem>>, vector<1x8xf32>,
    %c5_i32 = arith.constant 5 : i32
    %cst_46 = arith.constant dense<0.000000e+00> : vector<8x96xf32>
    %162 = tpu.matmul %155, %9, %cst_46 {dimension_numbers = #tpu.dot_dimension_numbers<[1], [0], [0], [1], [0, 0, 1, 1], [], []>} : vector<8x32xf32>, vector<32x96xf32>, vector<8x96xf32> -> vector<8x96xf32>
    %163 = arith.index_cast %c5_i32 : i32 to index
    %c0_47 = arith.constant 0 : index
    %c0_48 = arith.constant 0 : index
    %164 = vector.load %arg9[%163, %c0_47, %c0_48] : memref<8x8x96xf32, #tpu.memory_space<vmem>>, vector<1x8x96xf32>
    %165 = vector.shape_cast %164 : vector<1x8x96xf32> to vector<8x96xf32>
    %166 = vector.extract_strided_slice %165 {offsets = [0, 0], sizes = [8, 64], strides = [1, 1]} : vector<8x96xf32> to vector<8x64xf32>
    %167 = vector.extract_strided_slice %162 {offsets = [0, 0], sizes = [8, 64], strides = [1, 1]} : vector<8x96xf32> to vector<8x64xf32>
    %168 = arith.addf %166, %167 : vector<8x64xf32>
    %169 = arith.negf %168 : vector<8x64xf32>
    %170 = math.exp %169 : vector<8x64xf32>
    %cst_49 = arith.constant 1.000000e+00 : f32
    %171 = vector.broadcast %cst_49 : f32 to vector<8x64xf32>
    %172 = arith.addf %171, %170 : vector<8x64xf32>
    %173 = arith.divf %171, %172 : vector<8x64xf32>
    %174 = vector.extract_strided_slice %173 {offsets = [0, 0], sizes = [8, 32], strides = [1, 1]} : vector<8x64xf32> to vector<8x32xf32>
    %175 = vector.extract_strided_slice %173 {offsets = [0, 32], sizes = [8, 32], strides = [1, 1]} : vector<8x64xf32> to vector<8x32xf32>
    %176 = vector.extract_strided_slice %165 {offsets = [0, 64], sizes = [8, 32], strides = [1, 1]} : vector<8x96xf32> to vector<8x32xf32>
    %177 = vector.extract_strided_slice %162 {offsets = [0, 64], sizes = [8, 32], strides = [1, 1]} : vector<8x96xf32> to vector<8x32xf32>
    %178 = arith.addf %177, %12 : vector<8x32xf32>
    %179 = arith.mulf %174, %178 : vector<8x32xf32>
    %180 = arith.addf %176, %179 : vector<8x32xf32>
    %181 = math.tanh %180 : vector<8x32xf32>
    %182 = arith.subf %155, %181 : vector<8x32xf32>
    %183 = arith.mulf %175, %182 : vector<8x32xf32>
    %184 = arith.addf %181, %183 : vector<8x32xf32>
    %185 = arith.mulf %184, %15 : vector<8x32xf32>
    %cst_50 = arith.constant dense<0.000000e+00> : vector<8xf32>
    %186 = vector.multi_reduction <add>, %185, %cst_50 [1] : vector<8x32xf32> to vector<8xf32>
    %187 = vector.shape_cast %186 : vector<8xf32> to vector<8x1xf32>
    %188 = tpu.transpose %187, [1, 0] : vector<8x1xf32> -> vector<1x8xf32>
    %189 = arith.index_cast %c5_i32 : i32 to index
    %c0_51 = arith.constant 0 : index
    %190 = vector.load %arg10[%189, %c0_51] : memref<8x8xf32, #tpu.memory_space<vmem>>, vector<1x8xf32>
    tpu.vector_store %arg10[%189, %c0_51], %188 {strides = array<i32>} : memref<8x8xf32, #tpu.memory_space<vmem>>, vector<1x8xf32>,
    %c6_i32 = arith.constant 6 : i32
    %cst_52 = arith.constant dense<0.000000e+00> : vector<8x96xf32>
    %191 = tpu.matmul %184, %9, %cst_52 {dimension_numbers = #tpu.dot_dimension_numbers<[1], [0], [0], [1], [0, 0, 1, 1], [], []>} : vector<8x32xf32>, vector<32x96xf32>, vector<8x96xf32> -> vector<8x96xf32>
    %192 = arith.index_cast %c6_i32 : i32 to index
    %c0_53 = arith.constant 0 : index
    %c0_54 = arith.constant 0 : index
    %193 = vector.load %arg9[%192, %c0_53, %c0_54] : memref<8x8x96xf32, #tpu.memory_space<vmem>>, vector<1x8x96xf32>
    %194 = vector.shape_cast %193 : vector<1x8x96xf32> to vector<8x96xf32>
    %195 = vector.extract_strided_slice %194 {offsets = [0, 0], sizes = [8, 64], strides = [1, 1]} : vector<8x96xf32> to vector<8x64xf32>
    %196 = vector.extract_strided_slice %191 {offsets = [0, 0], sizes = [8, 64], strides = [1, 1]} : vector<8x96xf32> to vector<8x64xf32>
    %197 = arith.addf %195, %196 : vector<8x64xf32>
    %198 = arith.negf %197 : vector<8x64xf32>
    %199 = math.exp %198 : vector<8x64xf32>
    %cst_55 = arith.constant 1.000000e+00 : f32
    %200 = vector.broadcast %cst_55 : f32 to vector<8x64xf32>
    %201 = arith.addf %200, %199 : vector<8x64xf32>
    %202 = arith.divf %200, %201 : vector<8x64xf32>
    %203 = vector.extract_strided_slice %202 {offsets = [0, 0], sizes = [8, 32], strides = [1, 1]} : vector<8x64xf32> to vector<8x32xf32>
    %204 = vector.extract_strided_slice %202 {offsets = [0, 32], sizes = [8, 32], strides = [1, 1]} : vector<8x64xf32> to vector<8x32xf32>
    %205 = vector.extract_strided_slice %194 {offsets = [0, 64], sizes = [8, 32], strides = [1, 1]} : vector<8x96xf32> to vector<8x32xf32>
    %206 = vector.extract_strided_slice %191 {offsets = [0, 64], sizes = [8, 32], strides = [1, 1]} : vector<8x96xf32> to vector<8x32xf32>
    %207 = arith.addf %206, %12 : vector<8x32xf32>
    %208 = arith.mulf %203, %207 : vector<8x32xf32>
    %209 = arith.addf %205, %208 : vector<8x32xf32>
    %210 = math.tanh %209 : vector<8x32xf32>
    %211 = arith.subf %184, %210 : vector<8x32xf32>
    %212 = arith.mulf %204, %211 : vector<8x32xf32>
    %213 = arith.addf %210, %212 : vector<8x32xf32>
    %214 = arith.mulf %213, %15 : vector<8x32xf32>
    %cst_56 = arith.constant dense<0.000000e+00> : vector<8xf32>
    %215 = vector.multi_reduction <add>, %214, %cst_56 [1] : vector<8x32xf32> to vector<8xf32>
    %216 = vector.shape_cast %215 : vector<8xf32> to vector<8x1xf32>
    %217 = tpu.transpose %216, [1, 0] : vector<8x1xf32> -> vector<1x8xf32>
    %218 = arith.index_cast %c6_i32 : i32 to index
    %c0_57 = arith.constant 0 : index
    %219 = vector.load %arg10[%218, %c0_57] : memref<8x8xf32, #tpu.memory_space<vmem>>, vector<1x8xf32>
    tpu.vector_store %arg10[%218, %c0_57], %217 {strides = array<i32>} : memref<8x8xf32, #tpu.memory_space<vmem>>, vector<1x8xf32>,
    %c7_i32 = arith.constant 7 : i32
    %cst_58 = arith.constant dense<0.000000e+00> : vector<8x96xf32>
    %220 = tpu.matmul %213, %9, %cst_58 {dimension_numbers = #tpu.dot_dimension_numbers<[1], [0], [0], [1], [0, 0, 1, 1], [], []>} : vector<8x32xf32>, vector<32x96xf32>, vector<8x96xf32> -> vector<8x96xf32>
    %221 = arith.index_cast %c7_i32 : i32 to index
    %c0_59 = arith.constant 0 : index
    %c0_60 = arith.constant 0 : index
    %222 = vector.load %arg9[%221, %c0_59, %c0_60] : memref<8x8x96xf32, #tpu.memory_space<vmem>>, vector<1x8x96xf32>
    %223 = vector.shape_cast %222 : vector<1x8x96xf32> to vector<8x96xf32>
    %224 = vector.extract_strided_slice %223 {offsets = [0, 0], sizes = [8, 64], strides = [1, 1]} : vector<8x96xf32> to vector<8x64xf32>
    %225 = vector.extract_strided_slice %220 {offsets = [0, 0], sizes = [8, 64], strides = [1, 1]} : vector<8x96xf32> to vector<8x64xf32>
    %226 = arith.addf %224, %225 : vector<8x64xf32>
    %227 = arith.negf %226 : vector<8x64xf32>
    %228 = math.exp %227 : vector<8x64xf32>
    %cst_61 = arith.constant 1.000000e+00 : f32
    %229 = vector.broadcast %cst_61 : f32 to vector<8x64xf32>
    %230 = arith.addf %229, %228 : vector<8x64xf32>
    %231 = arith.divf %229, %230 : vector<8x64xf32>
    %232 = vector.extract_strided_slice %231 {offsets = [0, 0], sizes = [8, 32], strides = [1, 1]} : vector<8x64xf32> to vector<8x32xf32>
    %233 = vector.extract_strided_slice %231 {offsets = [0, 32], sizes = [8, 32], strides = [1, 1]} : vector<8x64xf32> to vector<8x32xf32>
    %234 = vector.extract_strided_slice %223 {offsets = [0, 64], sizes = [8, 32], strides = [1, 1]} : vector<8x96xf32> to vector<8x32xf32>
    %235 = vector.extract_strided_slice %220 {offsets = [0, 64], sizes = [8, 32], strides = [1, 1]} : vector<8x96xf32> to vector<8x32xf32>
    %236 = arith.addf %235, %12 : vector<8x32xf32>
    %237 = arith.mulf %232, %236 : vector<8x32xf32>
    %238 = arith.addf %234, %237 : vector<8x32xf32>
    %239 = math.tanh %238 : vector<8x32xf32>
    %240 = arith.subf %213, %239 : vector<8x32xf32>
    %241 = arith.mulf %233, %240 : vector<8x32xf32>
    %242 = arith.addf %239, %241 : vector<8x32xf32>
    %243 = arith.mulf %242, %15 : vector<8x32xf32>
    %cst_62 = arith.constant dense<0.000000e+00> : vector<8xf32>
    %244 = vector.multi_reduction <add>, %243, %cst_62 [1] : vector<8x32xf32> to vector<8xf32>
    %245 = vector.shape_cast %244 : vector<8xf32> to vector<8x1xf32>
    %246 = tpu.transpose %245, [1, 0] : vector<8x1xf32> -> vector<1x8xf32>
    %247 = arith.index_cast %c7_i32 : i32 to index
    %c0_63 = arith.constant 0 : index
    %248 = vector.load %arg10[%247, %c0_63] : memref<8x8xf32, #tpu.memory_space<vmem>>, vector<1x8xf32>
    tpu.vector_store %arg10[%247, %c0_63], %246 {strides = array<i32>} : memref<8x8xf32, #tpu.memory_space<vmem>>, vector<1x8xf32>,
    %c8_i32 = arith.constant 8 : i32
    %c0_64 = arith.constant 0 : index
    %c0_65 = arith.constant 0 : index
    %249 = vector.load %arg10[%c0_64, %c0_65] : memref<8x8xf32, #tpu.memory_space<vmem>>, vector<8x8xf32>
    %250 = tpu.transpose %249, [1, 0] : vector<8x8xf32> -> vector<8x8xf32>
    %c0_66 = arith.constant 0 : index
    %c0_67 = arith.constant 0 : index
    %251 = vector.load %arg7[%c0_66, %c0_67] : memref<1x1xf32, #tpu.memory_space<vmem>>, vector<1x1xf32>
    %252 = vector.broadcast %251 : vector<1x1xf32> to vector<8x8xf32>
    %253 = arith.addf %250, %252 : vector<8x8xf32>
    %254 = arith.negf %253 : vector<8x8xf32>
    %255 = math.exp %254 : vector<8x8xf32>
    %cst_68 = arith.constant 1.000000e+00 : f32
    %256 = vector.broadcast %cst_68 : f32 to vector<8x8xf32>
    %257 = arith.addf %256, %255 : vector<8x8xf32>
    %258 = arith.divf %256, %257 : vector<8x8xf32>
    %c0_69 = arith.constant 0 : index
    %c0_70 = arith.constant 0 : index
    %259 = vector.load %arg8[%c0_69, %c0_70] : memref<8x8xf32, #tpu.memory_space<vmem>>, vector<8x8xf32>
    tpu.vector_store %arg8[%c0_69, %c0_70], %258 {strides = array<i32>} : memref<8x8xf32, #tpu.memory_space<vmem>>, vector<8x8xf32>,
    return
  }
  func.func @transform_0(%arg0: i32) -> (i32, i32, i32) {
    %c0_i32 = arith.constant 0 : i32
    %c0_i32_0 = arith.constant 0 : i32
    %c0_i32_1 = arith.constant 0 : i32
    return %c0_i32, %arg0, %c0_i32_0 : i32, i32, i32
  }
  func.func @transform_1(%arg0: i32) -> (i32, i32) {
    %c0_i32 = arith.constant 0 : i32
    %c0_i32_0 = arith.constant 0 : i32
    %c0_i32_1 = arith.constant 0 : i32
    return %c0_i32, %c0_i32_0 : i32, i32
  }
  func.func @transform_2(%arg0: i32) -> (i32, i32) {
    %c0_i32 = arith.constant 0 : i32
    %c0_i32_0 = arith.constant 0 : i32
    %c0_i32_1 = arith.constant 0 : i32
    return %c0_i32, %c0_i32_0 : i32, i32
  }
  func.func @transform_3(%arg0: i32) -> (i32, i32) {
    %c0_i32 = arith.constant 0 : i32
    %c0_i32_0 = arith.constant 0 : i32
    %c0_i32_1 = arith.constant 0 : i32
    return %c0_i32, %c0_i32_0 : i32, i32
  }
  func.func @transform_4(%arg0: i32) -> (i32, i32) {
    %c0_i32 = arith.constant 0 : i32
    %c0_i32_0 = arith.constant 0 : i32
    %c0_i32_1 = arith.constant 0 : i32
    return %c0_i32, %c0_i32_0 : i32, i32
  }
  func.func @transform_5(%arg0: i32) -> (i32, i32) {
    %c0_i32 = arith.constant 0 : i32
    %c0_i32_0 = arith.constant 0 : i32
    %c0_i32_1 = arith.constant 0 : i32
    return %c0_i32, %c0_i32_0 : i32, i32
  }
  func.func @transform_6(%arg0: i32) -> (i32, i32) {
    %c0_i32 = arith.constant 0 : i32
    %c0_i32_0 = arith.constant 0 : i32
    %c0_i32_1 = arith.constant 0 : i32
    return %c0_i32, %c0_i32_0 : i32, i32
  }
  func.func @transform_7(%arg0: i32) -> (i32, i32) {
    %c0_i32 = arith.constant 0 : i32
    %c0_i32_0 = arith.constant 0 : i32
    return %arg0, %c0_i32 : i32, i32
  }
}

</mosaic_0001>

<llo_original>
// kernel: dl_model_forward.1
$region0: #{dl_model_forward.1}
  #allocation0 [shape = 'u32[]', space=smem, size = 0x4, offset = 0x4, fixed_abs, tag = 'smem constant byte address 0x4 - core index']
  #allocation1 [shape = 'u32[144,128]{1,0:T(1,128)}', space=vmem, size = 0x12000, scoped, tag = 'internal scratch']
  #allocation2 [shape = 'f32[8,8,96]{2,1,0:T(8,128)}', space=vmem, size = 0x8000, scoped, tag = 'scratch operand']
  #allocation3 [shape = 'f32[8,8]{1,0:T(8,128)}', space=vmem, size = 0x1000, scoped, tag = 'scratch operand']
  #allocation4 [shape = 'f32[1,1]{1,0:T(1,128)S(1)}', space=vmem, size = 0x200, scoped, tag = 'scoped memory for dl_model_forward.1']
  %s0 = inlined_call_operand.vmem [shape: f32[8,8,32], index: 0, kind: input, shape index: {}]
  %s1 = inlined_call_operand.vmem [shape: f32[32,96], index: 1, kind: input, shape index: {}]
  %s2 = inlined_call_operand.vmem [shape: f32[32,96], index: 2, kind: input, shape index: {}]
  %s3 = inlined_call_operand.vmem [shape: f32[1,96], index: 3, kind: input, shape index: {}]
  %s4 = inlined_call_operand.vmem [shape: f32[1,32], index: 4, kind: input, shape index: {}]
  %s5 = inlined_call_operand.vmem [shape: f32[1,32], index: 5, kind: input, shape index: {}]
  %s6 = inlined_call_operand.<no memory space> [shape: f32[1,1], index: 6, kind: input, shape index: {}]
  %s7 = inlined_call_operand.vmem [shape: f32[8,8], index: 7, kind: output, shape index: {}]
  %s8 = sld [smem:[#allocation0]]
  $region38: #{dl_model_forward.1} parent=0
    _
  %s10 = ssub.s32 1, %s8
  %s11 = scalar_select 0, %s10, %s8
  %v12 = vstv %s6
  %13 = vst [vmem:[#allocation4] sm:$0x1] %v12
  // Predicated region
  $region2: #{dl_model_forward.1} parent=0 // pred_check
    _
  $region3: #{dl_model_forward.1} parent=0 // pred_check_branch
    %15 = sbr.rel (0) target = $region5
  $region4: #{dl_model_forward.1} parent=0 // pred_region
    _
  $region5: #{dl_model_forward.1} parent=0 // pred_fallthru
    _
  // Predicated region
  $region6: #{dl_model_forward.1} parent=0 // pred_check
    _
  $region7: #{dl_model_forward.1} parent=0 // pred_check_branch
    %17 = sbr.rel (0) target = $region9
  $region8: #{dl_model_forward.1} parent=0 // pred_region
    _
  $region9: #{dl_model_forward.1} parent=0 // pred_fallthru
    _
  // Predicated region
  $region10: #{dl_model_forward.1} parent=0 // pred_check
    _
  $region11: #{dl_model_forward.1} parent=0 // pred_check_branch
    %19 = sbr.rel (0) target = $region13
  $region12: #{dl_model_forward.1} parent=0 // pred_region
    _
  $region13: #{dl_model_forward.1} parent=0 // pred_fallthru
    _
  // Predicated region
  $region14: #{dl_model_forward.1} parent=0 // pred_check
    _
  $region15: #{dl_model_forward.1} parent=0 // pred_check_branch
    %21 = sbr.rel (0) target = $region17
  $region16: #{dl_model_forward.1} parent=0 // pred_region
    _
  $region17: #{dl_model_forward.1} parent=0 // pred_fallthru
    _
  // Predicated region
  $region18: #{dl_model_forward.1} parent=0 // pred_check
    _
  $region19: #{dl_model_forward.1} parent=0 // pred_check_branch
    %23 = sbr.rel (0) target = $region21
  $region20: #{dl_model_forward.1} parent=0 // pred_region
    _
  $region21: #{dl_model_forward.1} parent=0 // pred_fallthru
    _
  // Predicated region
  $region22: #{dl_model_forward.1} parent=0 // pred_check
    _
  $region23: #{dl_model_forward.1} parent=0 // pred_check_branch
    %25 = sbr.rel (0) target = $region25
  $region24: #{dl_model_forward.1} parent=0 // pred_region
    _
  $region25: #{dl_model_forward.1} parent=0 // pred_fallthru
    _
  // Predicated region
  $region26: #{dl_model_forward.1} parent=0 // pred_check
    _
  $region27: #{dl_model_forward.1} parent=0 // pred_check_branch
    %27 = sbr.rel (0) target = $region29
  $region28: #{dl_model_forward.1} parent=0 // pred_region
    _
  $region29: #{dl_model_forward.1} parent=0 // pred_fallthru
    _
  %v28 = vld [vmem:[%s0] sm:$0xff]
  %v29 = vld [vmem:[%s0 + $0x8] sm:$0xff]
  %v30 = vld [vmem:[%s0 + $0x10] sm:$0xff]
  %v31 = vld [vmem:[%s0 + $0x18] sm:$0xff]
  %v32 = vld [vmem:[%s0 + $0x20] sm:$0xff]
  %v33 = vld [vmem:[%s0 + $0x28] sm:$0xff]
  %v34 = vld [vmem:[%s0 + $0x30] sm:$0xff]
  %v35 = vld [vmem:[%s0 + $0x38] sm:$0xff]
  %v36 = vld [vmem:[%s1] sm:$0xff]
  %v37 = vld [vmem:[%s1 + $0x8] sm:$0xff]
  %v38 = vld [vmem:[%s1 + $0x10] sm:$0xff]
  %v39 = vld [vmem:[%s1 + $0x18] sm:$0xff]
  %v40 = vld [vmem:[%s3] sm:$0x1]
  %v42 = vlaneseq
  %v43 = vshrl.u32 %v42, 7
  %v44 = vsub.s32 0, %v43
  %v45 = vrot.slane %v40, %v44
  %vm47 = vcmask 261120
  %v49 = vsel %vm47, %v28, 0
  %v52 = vsel %vm47, %v29, 0
  %v55 = vsel %vm47, %v30, 0
  %v58 = vsel %vm47, %v31, 0
  %v61 = vsel %vm47, %v32, 0
  %v64 = vsel %vm47, %v33, 0
  %v67 = vsel %vm47, %v34, 0
  %v70 = vsel %vm47, %v35, 0
  %72 = vmatprep.subr.mxu0 0.0
  %73 = vmatpush1.msra.mxu0 %v36
  %74 = vmatprep.subr.mxu0 0.0
  %75 = vmatpush1.msra.mxu0 %v37
  %76 = vmatprep.subr.mxu0 0.0
  %77 = vmatpush1.msra.mxu0 %v38
  %78 = vmatprep.subr.mxu0 0.0
  %79 = vmatpush1.msra.mxu0 %v39
  %80 = vmatprep.subr.mxu0 0.0
  %81 = vmatpush1.msra.mxu0 0.0
  %82 = vmatprep.subr.mxu0 0.0
  %83 = vmatpush1.msra.mxu0 0.0
  %84 = vmatprep.subr.mxu0 0.0
  %85 = vmatpush1.msra.mxu0 0.0
  %86 = vmatprep.subr.mxu0 0.0
  %87 = vmatpush1.msra.mxu0 0.0
  %88 = vmatprep.subr.mxu0 0.0
  %89 = vmatpush1.msra.mxu0 0.0
  %90 = vmatprep.subr.mxu0 0.0
  %91 = vmatpush1.msra.mxu0 0.0
  %92 = vmatprep.subr.mxu0 0.0
  %93 = vmatpush1.msra.mxu0 0.0
  %94 = vmatprep.subr.mxu0 0.0
  %95 = vmatpush1.msra.mxu0 0.0
  %96 = vmatprep.subr.mxu0 0.0
  %97 = vmatpush1.msra.mxu0 0.0
  %98 = vmatprep.subr.mxu0 0.0
  %99 = vmatpush1.msra.mxu0 0.0
  %100 = vmatprep.subr.mxu0 0.0
  %101 = vmatpush1.msra.mxu0 0.0
  %102 = vmatprep.subr.mxu0 0.0
  %103 = vmatpush1.msra.mxu0 0.0
  %104 = vmatprep.subr.mxu0 0.0
  %105 = vmatpush1.msra.mxu0 0.0
  %106 = vmatprep.subr.mxu0 0.0
  %107 = vmatpush1.msra.mxu0 0.0
  %108 = vmatprep.subr.mxu0 0.0
  %109 = vmatpush1.msra.mxu0 0.0
  %110 = vmatprep.subr.mxu0 0.0
  %111 = vmatpush1.msra.mxu0 0.0
  %112 = vmatprep.subr.mxu0 0.0
  %113 = vmatpush1.msra.mxu0 0.0
  %114 = vmatprep.subr.mxu0 0.0
  %115 = vmatpush1.msra.mxu0 0.0
  %116 = vmatprep.subr.mxu0 0.0
  %117 = vmatpush1.msra.mxu0 0.0
  %118 = vmatprep.subr.mxu0 0.0
  %119 = vmatpush1.msra.mxu0 0.0
  %120 = vmatprep.subr.mxu0 0.0
  %121 = vmatpush1.msra.mxu0 0.0
  %122 = vmatprep.subr.mxu0 0.0
  %123 = vmatpush1.msra.mxu0 0.0
  %124 = vmatprep.subr.mxu0 0.0
  %125 = vmatpush1.msra.mxu0 0.0
  %126 = vmatprep.subr.mxu0 0.0
  %127 = vmatpush1.msra.mxu0 0.0
  %128 = vmatprep.subr.mxu0 0.0
  %129 = vmatpush1.msra.mxu0 0.0
  %130 = vmatprep.subr.mxu0 0.0
  %131 = vmatpush1.msra.mxu0 0.0
  %132 = vmatprep.subr.mxu0 0.0
  %133 = vmatpush1.msra.mxu0 0.0
  %134 = vmatprep.subr.mxu0 0.0
  %135 = vmatpush1.msra.mxu0 0.0
  %136 = vmatprep.mubr.f32.mxu0 0.0
  %137 = vmatmul.mubr.f32.gmra.mrb[0].mxu0 %v49
  %v138 = vpop.f32.mrb[0].mxu0
  %v139 = vadd.f32 %v45, %v138
  %v140 = vpop.f32.mrb[0].mxu0
  %141 = vmatprep.mubr.f32.mxu0 0.0
  %142 = vmatmul.mubr.f32.gmra.mrb[0].mxu0 %v52
  %v143 = vpop.f32.mrb[0].mxu0
  %v144 = vadd.f32 %v45, %v143
  %v145 = vpop.f32.mrb[0].mxu0
  %146 = vmatprep.mubr.f32.mxu0 0.0
  %147 = vmatmul.mubr.f32.gmra.mrb[0].mxu0 %v55
  %v148 = vpop.f32.mrb[0].mxu0
  %v149 = vadd.f32 %v45, %v148
  %v150 = vpop.f32.mrb[0].mxu0
  %151 = vmatprep.mubr.f32.mxu0 0.0
  %152 = vmatmul.mubr.f32.gmra.mrb[0].mxu0 %v58
  %v153 = vpop.f32.mrb[0].mxu0
  %v154 = vadd.f32 %v45, %v153
  %v155 = vpop.f32.mrb[0].mxu0
  %156 = vmatprep.mubr.f32.mxu0 0.0
  %157 = vmatmul.mubr.f32.gmra.mrb[0].mxu0 %v61
  %v158 = vpop.f32.mrb[0].mxu0
  %v159 = vadd.f32 %v45, %v158
  %v160 = vpop.f32.mrb[0].mxu0
  %161 = vmatprep.mubr.f32.mxu0 0.0
  %162 = vmatmul.mubr.f32.gmra.mrb[0].mxu0 %v64
  %v163 = vpop.f32.mrb[0].mxu0
  %v164 = vadd.f32 %v45, %v163
  %v165 = vpop.f32.mrb[0].mxu0
  %166 = vmatprep.mubr.f32.mxu0 0.0
  %167 = vmatmul.mubr.f32.gmra.mrb[0].mxu0 %v67
  %v168 = vpop.f32.mrb[0].mxu0
  %v169 = vadd.f32 %v45, %v168
  %v170 = vpop.f32.mrb[0].mxu0
  %171 = vmatprep.mubr.f32.mxu0 0.0
  %172 = vmatmul.mubr.f32.gmra.mrb[0].mxu0 %v70
  %v173 = vpop.f32.mrb[0].mxu0
  %v174 = vadd.f32 %v45, %v173
  %v175 = vpop.f32.mrb[0].mxu0
  %176 = vdwg.mxu0
  %vm177 = vcmask 785408
  %178 = vst.msk [vmem:[#allocation2] sm:$0xff] %vm177, %v139
  %179 = vst.msk [vmem:[#allocation2 + $0x8] sm:$0xff] %vm177, %v144
  %180 = vst.msk [vmem:[#allocation2 + $0x10] sm:$0xff] %vm177, %v149
  %181 = vst.msk [vmem:[#allocation2 + $0x18] sm:$0xff] %vm177, %v154
  %182 = vst.msk [vmem:[#allocation2 + $0x20] sm:$0xff] %vm177, %v159
  %183 = vst.msk [vmem:[#allocation2 + $0x28] sm:$0xff] %vm177, %v164
  %184 = vst.msk [vmem:[#allocation2 + $0x30] sm:$0xff] %vm177, %v169
  %185 = vst.msk [vmem:[#allocation2 + $0x38] sm:$0xff] %vm177, %v174
  %v186 = vld [vmem:[%s2] sm:$0xff]
  %v187 = vld [vmem:[%s2 + $0x8] sm:$0xff]
  %v188 = vld [vmem:[%s2 + $0x10] sm:$0xff]
  %v189 = vld [vmem:[%s2 + $0x18] sm:$0xff]
  %v190 = vld [vmem:[%s4] sm:$0x1]
  %v192 = vlaneseq
  %v193 = vshrl.u32 %v192, 7
  %v194 = vsub.s32 0, %v193
  %v195 = vrot.slane %v190, %v194
  %v196 = vld [vmem:[%s5] sm:$0x1]
  %v198 = vlaneseq
  %v199 = vshrl.u32 %v198, 7
  %v200 = vsub.s32 0, %v199
  %v201 = vrot.slane %v196, %v200
  %v203 = vsel %vm47, 0.0, 0
  %205 = vmatprep.subr.mxu0 0.0
  %206 = vmatpush1.msra.mxu0 %v186
  %207 = vmatprep.subr.mxu0 0.0
  %208 = vmatpush1.msra.mxu0 %v187
  %209 = vmatprep.subr.mxu0 0.0
  %210 = vmatpush1.msra.mxu0 %v188
  %211 = vmatprep.subr.mxu0 0.0
  %212 = vmatpush1.msra.mxu0 %v189
  %213 = vmatprep.subr.mxu0 0.0
  %214 = vmatpush1.msra.mxu0 0.0
  %215 = vmatprep.subr.mxu0 0.0
  %216 = vmatpush1.msra.mxu0 0.0
  %217 = vmatprep.subr.mxu0 0.0
  %218 = vmatpush1.msra.mxu0 0.0
  %219 = vmatprep.subr.mxu0 0.0
  %220 = vmatpush1.msra.mxu0 0.0
  %221 = vmatprep.subr.mxu0 0.0
  %222 = vmatpush1.msra.mxu0 0.0
  %223 = vmatprep.subr.mxu0 0.0
  %224 = vmatpush1.msra.mxu0 0.0
  %225 = vmatprep.subr.mxu0 0.0
  %226 = vmatpush1.msra.mxu0 0.0
  %227 = vmatprep.subr.mxu0 0.0
  %228 = vmatpush1.msra.mxu0 0.0
  %229 = vmatprep.subr.mxu0 0.0
  %230 = vmatpush1.msra.mxu0 0.0
  %231 = vmatprep.subr.mxu0 0.0
  %232 = vmatpush1.msra.mxu0 0.0
  %233 = vmatprep.subr.mxu0 0.0
  %234 = vmatpush1.msra.mxu0 0.0
  %235 = vmatprep.subr.mxu0 0.0
  %236 = vmatpush1.msra.mxu0 0.0
  %237 = vmatprep.subr.mxu0 0.0
  %238 = vmatpush1.msra.mxu0 0.0
  %239 = vmatprep.subr.mxu0 0.0
  %240 = vmatpush1.msra.mxu0 0.0
  %241 = vmatprep.subr.mxu0 0.0
  %242 = vmatpush1.msra.mxu0 0.0
  %243 = vmatprep.subr.mxu0 0.0
  %244 = vmatpush1.msra.mxu0 0.0
  %245 = vmatprep.subr.mxu0 0.0
  %246 = vmatpush1.msra.mxu0 0.0
  %247 = vmatprep.subr.mxu0 0.0
  %248 = vmatpush1.msra.mxu0 0.0
  %249 = vmatprep.subr.mxu0 0.0
  %250 = vmatpush1.msra.mxu0 0.0
  %251 = vmatprep.subr.mxu0 0.0
  %252 = vmatpush1.msra.mxu0 0.0
  %253 = vmatprep.subr.mxu0 0.0
  %254 = vmatpush1.msra.mxu0 0.0
  %255 = vmatprep.subr.mxu0 0.0
  %256 = vmatpush1.msra.mxu0 0.0
  %257 = vmatprep.subr.mxu0 0.0
  %258 = vmatpush1.msra.mxu0 0.0
  %259 = vmatprep.subr.mxu0 0.0
  %260 = vmatpush1.msra.mxu0 0.0
  %261 = vmatprep.subr.mxu0 0.0
  %262 = vmatpush1.msra.mxu0 0.0
  %263 = vmatprep.subr.mxu0 0.0
  %264 = vmatpush1.msra.mxu0 0.0
  %265 = vmatprep.subr.mxu0 0.0
  %266 = vmatpush1.msra.mxu0 0.0
  %267 = vmatprep.subr.mxu0 0.0
  %268 = vmatpush1.msra.mxu0 0.0
  %269 = vmatprep.mubr.f32.mxu0 0.0
  %270 = vmatmul.mubr.f32.gmra.mrb[0].mxu0 %v203
  %v271 = vpop.f32.mrb[0].mxu0
  %v272 = vadd.f32 0.0, %v271
  %v273 = vpop.f32.mrb[0].mxu0
  %274 = vdwg.mxu0
  %v275 = vld [vmem:[#allocation2] sm:$0xff]
  %v276 = vadd.f32 %v275, %v272
  %v277 = vxor.u32 %v276, 2147483648
  %v278 = vmul.f32 %v277, 1.442695
  %v279 = vpow.pop %v278
  %v280 = vadd.f32 %v279, 1.0
  %v281 = vrcp.pop %v280
  %v282 = vmul.f32 1.0, %v281
  %283 = vrot.lane.b32.xlu0 %v195, 64
  %v284 = vpop.permute.xlu0 %283
  %v286 = vadd.f32 %v272, %v284
  %288 = vrot.lane.b32.xlu0 %v286, 64
  %v289 = vpop.permute.xlu0 %288
  %v291 = vmul.f32 %v282, %v289
  %293 = vrot.lane.b32.xlu0 %v291, 64
  %v294 = vpop.permute.xlu0 %293
  %v296 = vadd.f32 %v275, %v294
  %v297 = vtanh.pop %v296
  %v298 = vsub.f32 0.0, %v297
  %300 = vrot.lane.b32.xlu0 %v298, 96
  %v301 = vpop.permute.xlu0 %300
  %v303 = vmul.f32 %v282, %v301
  %305 = vrot.lane.b32.xlu0 %v303, 32
  %v306 = vpop.permute.xlu0 %305
  %v308 = vadd.f32 %v297, %v306
  %309 = vrot.lane.b32.xlu0 %v201, 64
  %v310 = vpop.permute.xlu0 %309
  %v312 = vmul.f32 %v308, %v310
  %314 = vrot.lane.b32.xlu0 %v312, 64
  %v315 = vpop.permute.xlu0 %314
  %v317 = vsel %vm47, %v315, 0.0
  %318 = vadd.xlane.f32.xlu0 %v317
  %v319 = vpop.xlane.xlu0 %318
  %320 = vxpose.xlu0.b32.start [1/16] %v319, 128
  %321 = vxpose.xlu0.b32.cont [2/16] 0.0, 128
  %322 = vxpose.xlu0.b32.cont [3/16] 0.0, 128
  %323 = vxpose.xlu0.b32.cont [4/16] 0.0, 128
  %324 = vxpose.xlu0.b32.cont [5/16] 0.0, 128
  %325 = vxpose.xlu0.b32.cont [6/16] 0.0, 128
  %326 = vxpose.xlu0.b32.cont [7/16] 0.0, 128
  %327 = vxpose.xlu0.b32.cont [8/16] 0.0, 128
  %328 = vxpose.xlu0.b32.cont [9/16] 0.0, 128
  %329 = vxpose.xlu0.b32.cont [10/16] 0.0, 128
  %330 = vxpose.xlu0.b32.cont [11/16] 0.0, 128
  %331 = vxpose.xlu0.b32.cont [12/16] 0.0, 128
  %332 = vxpose.xlu0.b32.cont [13/16] 0.0, 128
  %333 = vxpose.xlu0.b32.cont [14/16] 0.0, 128
  %334 = vxpose.xlu0.b32.cont [15/16] 0.0, 128
  %335 = vxpose.xlu0.b32.end [16/16] 0.0, 128
  %v336 = vpop.trf.xlu0
  %v337 = vpop.trf.xlu0
  %v338 = vpop.trf.xlu0
  %v339 = vpop.trf.xlu0
  %v340 = vpop.trf.xlu0
  %v341 = vpop.trf.xlu0
  %v342 = vpop.trf.xlu0
  %v343 = vpop.trf.xlu0
  %v344 = vpop.trf.xlu0
  %v345 = vpop.trf.xlu0
  %v346 = vpop.trf.xlu0
  %v347 = vpop.trf.xlu0
  %v348 = vpop.trf.xlu0
  %v349 = vpop.trf.xlu0
  %v350 = vpop.trf.xlu0
  %v351 = vpop.trf.xlu0
  %vm352 = vcmask 57344
  %353 = vst.msk [vmem:[#allocation3] sm:$0x1] %vm352, %v336
  %355 = vrot.lane.b32.xlu0 %v308, 64
  %v356 = vpop.permute.xlu0 %355
  %v357 = vsel %vm47, %v356, 0
  %359 = vmatprep.subr.mxu0 0.0
  %360 = vmatpush1.msra.mxu0 %v186
  %361 = vmatprep.subr.mxu0 0.0
  %362 = vmatpush1.msra.mxu0 %v187
  %363 = vmatprep.subr.mxu0 0.0
  %364 = vmatpush1.msra.mxu0 %v188
  %365 = vmatprep.subr.mxu0 0.0
  %366 = vmatpush1.msra.mxu0 %v189
  %367 = vmatprep.subr.mxu0 0.0
  %368 = vmatpush1.msra.mxu0 0.0
  %369 = vmatprep.subr.mxu0 0.0
  %370 = vmatpush1.msra.mxu0 0.0
  %371 = vmatprep.subr.mxu0 0.0
  %372 = vmatpush1.msra.mxu0 0.0
  %373 = vmatprep.subr.mxu0 0.0
  %374 = vmatpush1.msra.mxu0 0.0
  %375 = vmatprep.subr.mxu0 0.0
  %376 = vmatpush1.msra.mxu0 0.0
  %377 = vmatprep.subr.mxu0 0.0
  %378 = vmatpush1.msra.mxu0 0.0
  %379 = vmatprep.subr.mxu0 0.0
  %380 = vmatpush1.msra.mxu0 0.0
  %381 = vmatprep.subr.mxu0 0.0
  %382 = vmatpush1.msra.mxu0 0.0
  %383 = vmatprep.subr.mxu0 0.0
  %384 = vmatpush1.msra.mxu0 0.0
  %385 = vmatprep.subr.mxu0 0.0
  %386 = vmatpush1.msra.mxu0 0.0
  %387 = vmatprep.subr.mxu0 0.0
  %388 = vmatpush1.msra.mxu0 0.0
  %389 = vmatprep.subr.mxu0 0.0
  %390 = vmatpush1.msra.mxu0 0.0
  %391 = vmatprep.subr.mxu0 0.0
  %392 = vmatpush1.msra.mxu0 0.0
  %393 = vmatprep.subr.mxu0 0.0
  %394 = vmatpush1.msra.mxu0 0.0
  %395 = vmatprep.subr.mxu0 0.0
  %396 = vmatpush1.msra.mxu0 0.0
  %397 = vmatprep.subr.mxu0 0.0
  %398 = vmatpush1.msra.mxu0 0.0
  %399 = vmatprep.subr.mxu0 0.0
  %400 = vmatpush1.msra.mxu0 0.0
  %401 = vmatprep.subr.mxu0 0.0
  %402 = vmatpush1.msra.mxu0 0.0
  %403 = vmatprep.subr.mxu0 0.0
  %404 = vmatpush1.msra.mxu0 0.0
  %405 = vmatprep.subr.mxu0 0.0
  %406 = vmatpush1.msra.mxu0 0.0
  %407 = vmatprep.subr.mxu0 0.0
  %408 = vmatpush1.msra.mxu0 0.0
  %409 = vmatprep.subr.mxu0 0.0
  %410 = vmatpush1.msra.mxu0 0.0
  %411 = vmatprep.subr.mxu0 0.0
  %412 = vmatpush1.msra.mxu0 0.0
  %413 = vmatprep.subr.mxu0 0.0
  %414 = vmatpush1.msra.mxu0 0.0
  %415 = vmatprep.subr.mxu0 0.0
  %416 = vmatpush1.msra.mxu0 0.0
  %417 = vmatprep.subr.mxu0 0.0
  %418 = vmatpush1.msra.mxu0 0.0
  %419 = vmatprep.subr.mxu0 0.0
  %420 = vmatpush1.msra.mxu0 0.0
  %421 = vmatprep.subr.mxu0 0.0
  %422 = vmatpush1.msra.mxu0 0.0
  %423 = vmatprep.mubr.f32.mxu0 0.0
  %424 = vmatmul.mubr.f32.gmra.mrb[0].mxu0 %v357
  %v425 = vpop.f32.mrb[0].mxu0
  %v426 = vadd.f32 0.0, %v425
  %v427 = vpop.f32.mrb[0].mxu0
  %428 = vdwg.mxu0
  %s429 = scalar_lea.vmem [#allocation2], 8
  %v430 = vld [vmem:[%s429] sm:$0xff]
  %v431 = vadd.f32 %v430, %v426
  %v432 = vxor.u32 %v431, 2147483648
  %v433 = vmul.f32 %v432, 1.442695
  %v434 = vpow.pop %v433
  %v435 = vadd.f32 %v434, 1.0
  %v436 = vrcp.pop %v435
  %v437 = vmul.f32 1.0, %v436
  %v438 = vadd.f32 %v426, %v284
  %440 = vrot.lane.b32.xlu0 %v438, 64
  %v441 = vpop.permute.xlu0 %440
  %v443 = vmul.f32 %v437, %v441
  %445 = vrot.lane.b32.xlu0 %v443, 64
  %v446 = vpop.permute.xlu0 %445
  %v448 = vadd.f32 %v430, %v446
  %v449 = vtanh.pop %v448
  %v450 = vsub.f32 %v308, %v449
  %452 = vrot.lane.b32.xlu0 %v450, 96
  %v453 = vpop.permute.xlu0 %452
  %v455 = vmul.f32 %v437, %v453
  %457 = vrot.lane.b32.xlu0 %v455, 32
  %v458 = vpop.permute.xlu0 %457
  %v460 = vadd.f32 %v449, %v458
  %v461 = vmul.f32 %v460, %v310
  %463 = vrot.lane.b32.xlu0 %v461, 64
  %v464 = vpop.permute.xlu0 %463
  %v466 = vsel %vm47, %v464, 0.0
  %467 = vadd.xlane.f32.xlu0 %v466
  %v468 = vpop.xlane.xlu0 %467
  %469 = vxpose.xlu0.b32.start [1/16] %v468, 128
  %470 = vxpose.xlu0.b32.cont [2/16] 0.0, 128
  %471 = vxpose.xlu0.b32.cont [3/16] 0.0, 128
  %472 = vxpose.xlu0.b32.cont [4/16] 0.0, 128
  %473 = vxpose.xlu0.b32.cont [5/16] 0.0, 128
  %474 = vxpose.xlu0.b32.cont [6/16] 0.0, 128
  %475 = vxpose.xlu0.b32.cont [7/16] 0.0, 128
  %476 = vxpose.xlu0.b32.cont [8/16] 0.0, 128
  %477 = vxpose.xlu0.b32.cont [9/16] 0.0, 128
  %478 = vxpose.xlu0.b32.cont [10/16] 0.0, 128
  %479 = vxpose.xlu0.b32.cont [11/16] 0.0, 128
  %480 = vxpose.xlu0.b32.cont [12/16] 0.0, 128
  %481 = vxpose.xlu0.b32.cont [13/16] 0.0, 128
  %482 = vxpose.xlu0.b32.cont [14/16] 0.0, 128
  %483 = vxpose.xlu0.b32.cont [15/16] 0.0, 128
  %484 = vxpose.xlu0.b32.end [16/16] 0.0, 128
  %v485 = vpop.trf.xlu0
  %v486 = vpop.trf.xlu0
  %v487 = vpop.trf.xlu0
  %v488 = vpop.trf.xlu0
  %v489 = vpop.trf.xlu0
  %v490 = vpop.trf.xlu0
  %v491 = vpop.trf.xlu0
  %v492 = vpop.trf.xlu0
  %v493 = vpop.trf.xlu0
  %v494 = vpop.trf.xlu0
  %v495 = vpop.trf.xlu0
  %v496 = vpop.trf.xlu0
  %v497 = vpop.trf.xlu0
  %v498 = vpop.trf.xlu0
  %v499 = vpop.trf.xlu0
  %v500 = vpop.trf.xlu0
  %501 = vst.msk [vmem:[#allocation3 + $0x1] sm:$0x1] %vm352, %v485
  %503 = vrot.lane.b32.xlu0 %v460, 64
  %v504 = vpop.permute.xlu0 %503
  %v505 = vsel %vm47, %v504, 0
  %507 = vmatprep.subr.mxu0 0.0
  %508 = vmatpush1.msra.mxu0 %v186
  %509 = vmatprep.subr.mxu0 0.0
  %510 = vmatpush1.msra.mxu0 %v187
  %511 = vmatprep.subr.mxu0 0.0
  %512 = vmatpush1.msra.mxu0 %v188
  %513 = vmatprep.subr.mxu0 0.0
  %514 = vmatpush1.msra.mxu0 %v189
  %515 = vmatprep.subr.mxu0 0.0
  %516 = vmatpush1.msra.mxu0 0.0
  %517 = vmatprep.subr.mxu0 0.0
  %518 = vmatpush1.msra.mxu0 0.0
  %519 = vmatprep.subr.mxu0 0.0
  %520 = vmatpush1.msra.mxu0 0.0
  %521 = vmatprep.subr.mxu0 0.0
  %522 = vmatpush1.msra.mxu0 0.0
  %523 = vmatprep.subr.mxu0 0.0
  %524 = vmatpush1.msra.mxu0 0.0
  %525 = vmatprep.subr.mxu0 0.0
  %526 = vmatpush1.msra.mxu0 0.0
  %527 = vmatprep.subr.mxu0 0.0
  %528 = vmatpush1.msra.mxu0 0.0
  %529 = vmatprep.subr.mxu0 0.0
  %530 = vmatpush1.msra.mxu0 0.0
  %531 = vmatprep.subr.mxu0 0.0
  %532 = vmatpush1.msra.mxu0 0.0
  %533 = vmatprep.subr.mxu0 0.0
  %534 = vmatpush1.msra.mxu0 0.0
  %535 = vmatprep.subr.mxu0 0.0
  %536 = vmatpush1.msra.mxu0 0.0
  %537 = vmatprep.subr.mxu0 0.0
  %538 = vmatpush1.msra.mxu0 0.0
  %539 = vmatprep.subr.mxu0 0.0
  %540 = vmatpush1.msra.mxu0 0.0
  %541 = vmatprep.subr.mxu0 0.0
  %542 = vmatpush1.msra.mxu0 0.0
  %543 = vmatprep.subr.mxu0 0.0
  %544 = vmatpush1.msra.mxu0 0.0
  %545 = vmatprep.subr.mxu0 0.0
  %546 = vmatpush1.msra.mxu0 0.0
  %547 = vmatprep.subr.mxu0 0.0
  %548 = vmatpush1.msra.mxu0 0.0
  %549 = vmatprep.subr.mxu0 0.0
  %550 = vmatpush1.msra.mxu0 0.0
  %551 = vmatprep.subr.mxu0 0.0
  %552 = vmatpush1.msra.mxu0 0.0
  %553 = vmatprep.subr.mxu0 0.0
  %554 = vmatpush1.msra.mxu0 0.0
  %555 = vmatprep.subr.mxu0 0.0
  %556 = vmatpush1.msra.mxu0 0.0
  %557 = vmatprep.subr.mxu0 0.0
  %558 = vmatpush1.msra.mxu0 0.0
  %559 = vmatprep.subr.mxu0 0.0
  %560 = vmatpush1.msra.mxu0 0.0
  %561 = vmatprep.subr.mxu0 0.0
  %562 = vmatpush1.msra.mxu0 0.0
  %563 = vmatprep.subr.mxu0 0.0
  %564 = vmatpush1.msra.mxu0 0.0
  %565 = vmatprep.subr.mxu0 0.0
  %566 = vmatpush1.msra.mxu0 0.0
  %567 = vmatprep.subr.mxu0 0.0
  %568 = vmatpush1.msra.mxu0 0.0
  %569 = vmatprep.subr.mxu0 0.0
  %570 = vmatpush1.msra.mxu0 0.0
  %571 = vmatprep.mubr.f32.mxu0 0.0
  %572 = vmatmul.mubr.f32.gmra.mrb[0].mxu0 %v505
  %v573 = vpop.f32.mrb[0].mxu0
  %v574 = vadd.f32 0.0, %v573
  %v575 = vpop.f32.mrb[0].mxu0
  %576 = vdwg.mxu0
  %s577 = scalar_lea.vmem [#allocation2], 16
  %v578 = vld [vmem:[%s577] sm:$0xff]
  %v579 = vadd.f32 %v578, %v574
  %v580 = vxor.u32 %v579, 2147483648
  %v581 = vmul.f32 %v580, 1.442695
  %v582 = vpow.pop %v581
  %v583 = vadd.f32 %v582, 1.0
  %v584 = vrcp.pop %v583
  %v585 = vmul.f32 1.0, %v584
  %v586 = vadd.f32 %v574, %v284
  %588 = vrot.lane.b32.xlu0 %v586, 64
  %v589 = vpop.permute.xlu0 %588
  %v591 = vmul.f32 %v585, %v589
  %593 = vrot.lane.b32.xlu0 %v591, 64
  %v594 = vpop.permute.xlu0 %593
  %v596 = vadd.f32 %v578, %v594
  %v597 = vtanh.pop %v596
  %v598 = vsub.f32 %v460, %v597
  %600 = vrot.lane.b32.xlu0 %v598, 96
  %v601 = vpop.permute.xlu0 %600
  %v603 = vmul.f32 %v585, %v601
  %605 = vrot.lane.b32.xlu0 %v603, 32
  %v606 = vpop.permute.xlu0 %605
  %v608 = vadd.f32 %v597, %v606
  %v609 = vmul.f32 %v608, %v310
  %611 = vrot.lane.b32.xlu0 %v609, 64
  %v612 = vpop.permute.xlu0 %611
  %v614 = vsel %vm47, %v612, 0.0
  %615 = vadd.xlane.f32.xlu0 %v614
  %v616 = vpop.xlane.xlu0 %615
  %617 = vxpose.xlu0.b32.start [1/16] %v616, 128
  %618 = vxpose.xlu0.b32.cont [2/16] 0.0, 128
  %619 = vxpose.xlu0.b32.cont [3/16] 0.0, 128
  %620 = vxpose.xlu0.b32.cont [4/16] 0.0, 128
  %621 = vxpose.xlu0.b32.cont [5/16] 0.0, 128
  %622 = vxpose.xlu0.b32.cont [6/16] 0.0, 128
  %623 = vxpose.xlu0.b32.cont [7/16] 0.0, 128
  %624 = vxpose.xlu0.b32.cont [8/16] 0.0, 128
  %625 = vxpose.xlu0.b32.cont [9/16] 0.0, 128
  %626 = vxpose.xlu0.b32.cont [10/16] 0.0, 128
  %627 = vxpose.xlu0.b32.cont [11/16] 0.0, 128
  %628 = vxpose.xlu0.b32.cont [12/16] 0.0, 128
  %629 = vxpose.xlu0.b32.cont [13/16] 0.0, 128
  %630 = vxpose.xlu0.b32.cont [14/16] 0.0, 128
  %631 = vxpose.xlu0.b32.cont [15/16] 0.0, 128
  %632 = vxpose.xlu0.b32.end [16/16] 0.0, 128
  %v633 = vpop.trf.xlu0
  %v634 = vpop.trf.xlu0
  %v635 = vpop.trf.xlu0
  %v636 = vpop.trf.xlu0
  %v637 = vpop.trf.xlu0
  %v638 = vpop.trf.xlu0
  %v639 = vpop.trf.xlu0
  %v640 = vpop.trf.xlu0
  %v641 = vpop.trf.xlu0
  %v642 = vpop.trf.xlu0
  %v643 = vpop.trf.xlu0
  %v644 = vpop.trf.xlu0
  %v645 = vpop.trf.xlu0
  %v646 = vpop.trf.xlu0
  %v647 = vpop.trf.xlu0
  %v648 = vpop.trf.xlu0
  %649 = vst.msk [vmem:[#allocation3 + $0x2] sm:$0x1] %vm352, %v633
  %651 = vrot.lane.b32.xlu0 %v608, 64
  %v652 = vpop.permute.xlu0 %651
  %v653 = vsel %vm47, %v652, 0
  %655 = vmatprep.subr.mxu0 0.0
  %656 = vmatpush1.msra.mxu0 %v186
  %657 = vmatprep.subr.mxu0 0.0
  %658 = vmatpush1.msra.mxu0 %v187
  %659 = vmatprep.subr.mxu0 0.0
  %660 = vmatpush1.msra.mxu0 %v188
  %661 = vmatprep.subr.mxu0 0.0
  %662 = vmatpush1.msra.mxu0 %v189
  %663 = vmatprep.subr.mxu0 0.0
  %664 = vmatpush1.msra.mxu0 0.0
  %665 = vmatprep.subr.mxu0 0.0
  %666 = vmatpush1.msra.mxu0 0.0
  %667 = vmatprep.subr.mxu0 0.0
  %668 = vmatpush1.msra.mxu0 0.0
  %669 = vmatprep.subr.mxu0 0.0
  %670 = vmatpush1.msra.mxu0 0.0
  %671 = vmatprep.subr.mxu0 0.0
  %672 = vmatpush1.msra.mxu0 0.0
  %673 = vmatprep.subr.mxu0 0.0
  %674 = vmatpush1.msra.mxu0 0.0
  %675 = vmatprep.subr.mxu0 0.0
  %676 = vmatpush1.msra.mxu0 0.0
  %677 = vmatprep.subr.mxu0 0.0
  %678 = vmatpush1.msra.mxu0 0.0
  %679 = vmatprep.subr.mxu0 0.0
  %680 = vmatpush1.msra.mxu0 0.0
  %681 = vmatprep.subr.mxu0 0.0
  %682 = vmatpush1.msra.mxu0 0.0
  %683 = vmatprep.subr.mxu0 0.0
  %684 = vmatpush1.msra.mxu0 0.0
  %685 = vmatprep.subr.mxu0 0.0
  %686 = vmatpush1.msra.mxu0 0.0
  %687 = vmatprep.subr.mxu0 0.0
  %688 = vmatpush1.msra.mxu0 0.0
  %689 = vmatprep.subr.mxu0 0.0
  %690 = vmatpush1.msra.mxu0 0.0
  %691 = vmatprep.subr.mxu0 0.0
  %692 = vmatpush1.msra.mxu0 0.0
  %693 = vmatprep.subr.mxu0 0.0
  %694 = vmatpush1.msra.mxu0 0.0
  %695 = vmatprep.subr.mxu0 0.0
  %696 = vmatpush1.msra.mxu0 0.0
  %697 = vmatprep.subr.mxu0 0.0
  %698 = vmatpush1.msra.mxu0 0.0
  %699 = vmatprep.subr.mxu0 0.0
  %700 = vmatpush1.msra.mxu0 0.0
  %701 = vmatprep.subr.mxu0 0.0
  %702 = vmatpush1.msra.mxu0 0.0
  %703 = vmatprep.subr.mxu0 0.0
  %704 = vmatpush1.msra.mxu0 0.0
  %705 = vmatprep.subr.mxu0 0.0
  %706 = vmatpush1.msra.mxu0 0.0
  %707 = vmatprep.subr.mxu0 0.0
  %708 = vmatpush1.msra.mxu0 0.0
  %709 = vmatprep.subr.mxu0 0.0
  %710 = vmatpush1.msra.mxu0 0.0
  %711 = vmatprep.subr.mxu0 0.0
  %712 = vmatpush1.msra.mxu0 0.0
  %713 = vmatprep.subr.mxu0 0.0
  %714 = vmatpush1.msra.mxu0 0.0
  %715 = vmatprep.subr.mxu0 0.0
  %716 = vmatpush1.msra.mxu0 0.0
  %717 = vmatprep.subr.mxu0 0.0
  %718 = vmatpush1.msra.mxu0 0.0
  %719 = vmatprep.mubr.f32.mxu0 0.0
  %720 = vmatmul.mubr.f32.gmra.mrb[0].mxu0 %v653
  %v721 = vpop.f32.mrb[0].mxu0
  %v722 = vadd.f32 0.0, %v721
  %v723 = vpop.f32.mrb[0].mxu0
  %724 = vdwg.mxu0
  %s725 = scalar_lea.vmem [#allocation2], 24
  %v726 = vld [vmem:[%s725] sm:$0xff]
  %v727 = vadd.f32 %v726, %v722
  %v728 = vxor.u32 %v727, 2147483648
  %v729 = vmul.f32 %v728, 1.442695
  %v730 = vpow.pop %v729
  %v731 = vadd.f32 %v730, 1.0
  %v732 = vrcp.pop %v731
  %v733 = vmul.f32 1.0, %v732
  %v734 = vadd.f32 %v722, %v284
  %736 = vrot.lane.b32.xlu0 %v734, 64
  %v737 = vpop.permute.xlu0 %736
  %v739 = vmul.f32 %v733, %v737
  %741 = vrot.lane.b32.xlu0 %v739, 64
  %v742 = vpop.permute.xlu0 %741
  %v744 = vadd.f32 %v726, %v742
  %v745 = vtanh.pop %v744
  %v746 = vsub.f32 %v608, %v745
  %748 = vrot.lane.b32.xlu0 %v746, 96
  %v749 = vpop.permute.xlu0 %748
  %v751 = vmul.f32 %v733, %v749
  %753 = vrot.lane.b32.xlu0 %v751, 32
  %v754 = vpop.permute.xlu0 %753
  %v756 = vadd.f32 %v745, %v754
  %v757 = vmul.f32 %v756, %v310
  %759 = vrot.lane.b32.xlu0 %v757, 64
  %v760 = vpop.permute.xlu0 %759
  %v762 = vsel %vm47, %v760, 0.0
  %763 = vadd.xlane.f32.xlu0 %v762
  %v764 = vpop.xlane.xlu0 %763
  %765 = vxpose.xlu0.b32.start [1/16] %v764, 128
  %766 = vxpose.xlu0.b32.cont [2/16] 0.0, 128
  %767 = vxpose.xlu0.b32.cont [3/16] 0.0, 128
  %768 = vxpose.xlu0.b32.cont [4/16] 0.0, 128
  %769 = vxpose.xlu0.b32.cont [5/16] 0.0, 128
  %770 = vxpose.xlu0.b32.cont [6/16] 0.0, 128
  %771 = vxpose.xlu0.b32.cont [7/16] 0.0, 128
  %772 = vxpose.xlu0.b32.cont [8/16] 0.0, 128
  %773 = vxpose.xlu0.b32.cont [9/16] 0.0, 128
  %774 = vxpose.xlu0.b32.cont [10/16] 0.0, 128
  %775 = vxpose.xlu0.b32.cont [11/16] 0.0, 128
  %776 = vxpose.xlu0.b32.cont [12/16] 0.0, 128
  %777 = vxpose.xlu0.b32.cont [13/16] 0.0, 128
  %778 = vxpose.xlu0.b32.cont [14/16] 0.0, 128
  %779 = vxpose.xlu0.b32.cont [15/16] 0.0, 128
  %780 = vxpose.xlu0.b32.end [16/16] 0.0, 128
  %v781 = vpop.trf.xlu0
  %v782 = vpop.trf.xlu0
  %v783 = vpop.trf.xlu0
  %v784 = vpop.trf.xlu0
  %v785 = vpop.trf.xlu0
  %v786 = vpop.trf.xlu0
  %v787 = vpop.trf.xlu0
  %v788 = vpop.trf.xlu0
  %v789 = vpop.trf.xlu0
  %v790 = vpop.trf.xlu0
  %v791 = vpop.trf.xlu0
  %v792 = vpop.trf.xlu0
  %v793 = vpop.trf.xlu0
  %v794 = vpop.trf.xlu0
  %v795 = vpop.trf.xlu0
  %v796 = vpop.trf.xlu0
  %797 = vst.msk [vmem:[#allocation3 + $0x3] sm:$0x1] %vm352, %v781
  %799 = vrot.lane.b32.xlu0 %v756, 64
  %v800 = vpop.permute.xlu0 %799
  %v801 = vsel %vm47, %v800, 0
  %803 = vmatprep.subr.mxu0 0.0
  %804 = vmatpush1.msra.mxu0 %v186
  %805 = vmatprep.subr.mxu0 0.0
  %806 = vmatpush1.msra.mxu0 %v187
  %807 = vmatprep.subr.mxu0 0.0
  %808 = vmatpush1.msra.mxu0 %v188
  %809 = vmatprep.subr.mxu0 0.0
  %810 = vmatpush1.msra.mxu0 %v189
  %811 = vmatprep.subr.mxu0 0.0
  %812 = vmatpush1.msra.mxu0 0.0
  %813 = vmatprep.subr.mxu0 0.0
  %814 = vmatpush1.msra.mxu0 0.0
  %815 = vmatprep.subr.mxu0 0.0
  %816 = vmatpush1.msra.mxu0 0.0
  %817 = vmatprep.subr.mxu0 0.0
  %818 = vmatpush1.msra.mxu0 0.0
  %819 = vmatprep.subr.mxu0 0.0
  %820 = vmatpush1.msra.mxu0 0.0
  %821 = vmatprep.subr.mxu0 0.0
  %822 = vmatpush1.msra.mxu0 0.0
  %823 = vmatprep.subr.mxu0 0.0
  %824 = vmatpush1.msra.mxu0 0.0
  %825 = vmatprep.subr.mxu0 0.0
  %826 = vmatpush1.msra.mxu0 0.0
  %827 = vmatprep.subr.mxu0 0.0
  %828 = vmatpush1.msra.mxu0 0.0
  %829 = vmatprep.subr.mxu0 0.0
  %830 = vmatpush1.msra.mxu0 0.0
  %831 = vmatprep.subr.mxu0 0.0
  %832 = vmatpush1.msra.mxu0 0.0
  %833 = vmatprep.subr.mxu0 0.0
  %834 = vmatpush1.msra.mxu0 0.0
  %835 = vmatprep.subr.mxu0 0.0
  %836 = vmatpush1.msra.mxu0 0.0
  %837 = vmatprep.subr.mxu0 0.0
  %838 = vmatpush1.msra.mxu0 0.0
  %839 = vmatprep.subr.mxu0 0.0
  %840 = vmatpush1.msra.mxu0 0.0
  %841 = vmatprep.subr.mxu0 0.0
  %842 = vmatpush1.msra.mxu0 0.0
  %843 = vmatprep.subr.mxu0 0.0
  %844 = vmatpush1.msra.mxu0 0.0
  %845 = vmatprep.subr.mxu0 0.0
  %846 = vmatpush1.msra.mxu0 0.0
  %847 = vmatprep.subr.mxu0 0.0
  %848 = vmatpush1.msra.mxu0 0.0
  %849 = vmatprep.subr.mxu0 0.0
  %850 = vmatpush1.msra.mxu0 0.0
  %851 = vmatprep.subr.mxu0 0.0
  %852 = vmatpush1.msra.mxu0 0.0
  %853 = vmatprep.subr.mxu0 0.0
  %854 = vmatpush1.msra.mxu0 0.0
  %855 = vmatprep.subr.mxu0 0.0
  %856 = vmatpush1.msra.mxu0 0.0
  %857 = vmatprep.subr.mxu0 0.0
  %858 = vmatpush1.msra.mxu0 0.0
  %859 = vmatprep.subr.mxu0 0.0
  %860 = vmatpush1.msra.mxu0 0.0
  %861 = vmatprep.subr.mxu0 0.0
  %862 = vmatpush1.msra.mxu0 0.0
  %863 = vmatprep.subr.mxu0 0.0
  %864 = vmatpush1.msra.mxu0 0.0
  %865 = vmatprep.subr.mxu0 0.0
  %866 = vmatpush1.msra.mxu0 0.0
  %867 = vmatprep.mubr.f32.mxu0 0.0
  %868 = vmatmul.mubr.f32.gmra.mrb[0].mxu0 %v801
  %v869 = vpop.f32.mrb[0].mxu0
  %v870 = vadd.f32 0.0, %v869
  %v871 = vpop.f32.mrb[0].mxu0
  %872 = vdwg.mxu0
  %s873 = scalar_lea.vmem [#allocation2], 32
  %v874 = vld [vmem:[%s873] sm:$0xff]
  %v875 = vadd.f32 %v874, %v870
  %v876 = vxor.u32 %v875, 2147483648
  %v877 = vmul.f32 %v876, 1.442695
  %v878 = vpow.pop %v877
  %v879 = vadd.f32 %v878, 1.0
  %v880 = vrcp.pop %v879
  %v881 = vmul.f32 1.0, %v880
  %v882 = vadd.f32 %v870, %v284
  %884 = vrot.lane.b32.xlu0 %v882, 64
  %v885 = vpop.permute.xlu0 %884
  %v887 = vmul.f32 %v881, %v885
  %889 = vrot.lane.b32.xlu0 %v887, 64
  %v890 = vpop.permute.xlu0 %889
  %v892 = vadd.f32 %v874, %v890
  %v893 = vtanh.pop %v892
  %v894 = vsub.f32 %v756, %v893
  %896 = vrot.lane.b32.xlu0 %v894, 96
  %v897 = vpop.permute.xlu0 %896
  %v899 = vmul.f32 %v881, %v897
  %901 = vrot.lane.b32.xlu0 %v899, 32
  %v902 = vpop.permute.xlu0 %901
  %v904 = vadd.f32 %v893, %v902
  %v905 = vmul.f32 %v904, %v310
  %907 = vrot.lane.b32.xlu0 %v905, 64
  %v908 = vpop.permute.xlu0 %907
  %v910 = vsel %vm47, %v908, 0.0
  %911 = vadd.xlane.f32.xlu0 %v910
  %v912 = vpop.xlane.xlu0 %911
  %913 = vxpose.xlu0.b32.start [1/16] %v912, 128
  %914 = vxpose.xlu0.b32.cont [2/16] 0.0, 128
  %915 = vxpose.xlu0.b32.cont [3/16] 0.0, 128
  %916 = vxpose.xlu0.b32.cont [4/16] 0.0, 128
  %917 = vxpose.xlu0.b32.cont [5/16] 0.0, 128
  %918 = vxpose.xlu0.b32.cont [6/16] 0.0, 128
  %919 = vxpose.xlu0.b32.cont [7/16] 0.0, 128
  %920 = vxpose.xlu0.b32.cont [8/16] 0.0, 128
  %921 = vxpose.xlu0.b32.cont [9/16] 0.0, 128
  %922 = vxpose.xlu0.b32.cont [10/16] 0.0, 128
  %923 = vxpose.xlu0.b32.cont [11/16] 0.0, 128
  %924 = vxpose.xlu0.b32.cont [12/16] 0.0, 128
  %925 = vxpose.xlu0.b32.cont [13/16] 0.0, 128
  %926 = vxpose.xlu0.b32.cont [14/16] 0.0, 128
  %927 = vxpose.xlu0.b32.cont [15/16] 0.0, 128
  %928 = vxpose.xlu0.b32.end [16/16] 0.0, 128
  %v929 = vpop.trf.xlu0
  %v930 = vpop.trf.xlu0
  %v931 = vpop.trf.xlu0
  %v932 = vpop.trf.xlu0
  %v933 = vpop.trf.xlu0
  %v934 = vpop.trf.xlu0
  %v935 = vpop.trf.xlu0
  %v936 = vpop.trf.xlu0
  %v937 = vpop.trf.xlu0
  %v938 = vpop.trf.xlu0
  %v939 = vpop.trf.xlu0
  %v940 = vpop.trf.xlu0
  %v941 = vpop.trf.xlu0
  %v942 = vpop.trf.xlu0
  %v943 = vpop.trf.xlu0
  %v944 = vpop.trf.xlu0
  %945 = vst.msk [vmem:[#allocation3 + $0x4] sm:$0x1] %vm352, %v929
  %947 = vrot.lane.b32.xlu0 %v904, 64
  %v948 = vpop.permute.xlu0 %947
  %v949 = vsel %vm47, %v948, 0
  %951 = vmatprep.subr.mxu0 0.0
  %952 = vmatpush1.msra.mxu0 %v186
  %953 = vmatprep.subr.mxu0 0.0
  %954 = vmatpush1.msra.mxu0 %v187
  %955 = vmatprep.subr.mxu0 0.0
  %956 = vmatpush1.msra.mxu0 %v188
  %957 = vmatprep.subr.mxu0 0.0
  %958 = vmatpush1.msra.mxu0 %v189
  %959 = vmatprep.subr.mxu0 0.0
  %960 = vmatpush1.msra.mxu0 0.0
  %961 = vmatprep.subr.mxu0 0.0
  %962 = vmatpush1.msra.mxu0 0.0
  %963 = vmatprep.subr.mxu0 0.0
  %964 = vmatpush1.msra.mxu0 0.0
  %965 = vmatprep.subr.mxu0 0.0
  %966 = vmatpush1.msra.mxu0 0.0
  %967 = vmatprep.subr.mxu0 0.0
  %968 = vmatpush1.msra.mxu0 0.0
  %969 = vmatprep.subr.mxu0 0.0
  %970 = vmatpush1.msra.mxu0 0.0
  %971 = vmatprep.subr.mxu0 0.0
  %972 = vmatpush1.msra.mxu0 0.0
  %973 = vmatprep.subr.mxu0 0.0
  %974 = vmatpush1.msra.mxu0 0.0
  %975 = vmatprep.subr.mxu0 0.0
  %976 = vmatpush1.msra.mxu0 0.0
  %977 = vmatprep.subr.mxu0 0.0
  %978 = vmatpush1.msra.mxu0 0.0
  %979 = vmatprep.subr.mxu0 0.0
  %980 = vmatpush1.msra.mxu0 0.0
  %981 = vmatprep.subr.mxu0 0.0
  %982 = vmatpush1.msra.mxu0 0.0
  %983 = vmatprep.subr.mxu0 0.0
  %984 = vmatpush1.msra.mxu0 0.0
  %985 = vmatprep.subr.mxu0 0.0
  %986 = vmatpush1.msra.mxu0 0.0
  %987 = vmatprep.subr.mxu0 0.0
  %988 = vmatpush1.msra.mxu0 0.0
  %989 = vmatprep.subr.mxu0 0.0
  %990 = vmatpush1.msra.mxu0 0.0
  %991 = vmatprep.subr.mxu0 0.0
  %992 = vmatpush1.msra.mxu0 0.0
  %993 = vmatprep.subr.mxu0 0.0
  %994 = vmatpush1.msra.mxu0 0.0
  %995 = vmatprep.subr.mxu0 0.0
  %996 = vmatpush1.msra.mxu0 0.0
  %997 = vmatprep.subr.mxu0 0.0
  %998 = vmatpush1.msra.mxu0 0.0
  %999 = vmatprep.subr.mxu0 0.0
  %1000 = vmatpush1.msra.mxu0 0.0
  %1001 = vmatprep.subr.mxu0 0.0
  %1002 = vmatpush1.msra.mxu0 0.0
  %1003 = vmatprep.subr.mxu0 0.0
  %1004 = vmatpush1.msra.mxu0 0.0
  %1005 = vmatprep.subr.mxu0 0.0
  %1006 = vmatpush1.msra.mxu0 0.0
  %1007 = vmatprep.subr.mxu0 0.0
  %1008 = vmatpush1.msra.mxu0 0.0
  %1009 = vmatprep.subr.mxu0 0.0
  %1010 = vmatpush1.msra.mxu0 0.0
  %1011 = vmatprep.subr.mxu0 0.0
  %1012 = vmatpush1.msra.mxu0 0.0
  %1013 = vmatprep.subr.mxu0 0.0
  %1014 = vmatpush1.msra.mxu0 0.0
  %1015 = vmatprep.mubr.f32.mxu0 0.0
  %1016 = vmatmul.mubr.f32.gmra.mrb[0].mxu0 %v949
  %v1017 = vpop.f32.mrb[0].mxu0
  %v1018 = vadd.f32 0.0, %v1017
  %v1019 = vpop.f32.mrb[0].mxu0
  %1020 = vdwg.mxu0
  %s1021 = scalar_lea.vmem [#allocation2], 40
  %v1022 = vld [vmem:[%s1021] sm:$0xff]
  %v1023 = vadd.f32 %v1022, %v1018
  %v1024 = vxor.u32 %v1023, 2147483648
  %v1025 = vmul.f32 %v1024, 1.442695
  %v1026 = vpow.pop %v1025
  %v1027 = vadd.f32 %v1026, 1.0
  %v1028 = vrcp.pop %v1027
  %v1029 = vmul.f32 1.0, %v1028
  %v1030 = vadd.f32 %v1018, %v284
  %1032 = vrot.lane.b32.xlu0 %v1030, 64
  %v1033 = vpop.permute.xlu0 %1032
  %v1035 = vmul.f32 %v1029, %v1033
  %1037 = vrot.lane.b32.xlu0 %v1035, 64
  %v1038 = vpop.permute.xlu0 %1037
  %v1040 = vadd.f32 %v1022, %v1038
  %v1041 = vtanh.pop %v1040
  %v1042 = vsub.f32 %v904, %v1041
  %1044 = vrot.lane.b32.xlu0 %v1042, 96
  %v1045 = vpop.permute.xlu0 %1044
  %v1047 = vmul.f32 %v1029, %v1045
  %1049 = vrot.lane.b32.xlu0 %v1047, 32
  %v1050 = vpop.permute.xlu0 %1049
  %v1052 = vadd.f32 %v1041, %v1050
  %v1053 = vmul.f32 %v1052, %v310
  %1055 = vrot.lane.b32.xlu0 %v1053, 64
  %v1056 = vpop.permute.xlu0 %1055
  %v1058 = vsel %vm47, %v1056, 0.0
  %1059 = vadd.xlane.f32.xlu0 %v1058
  %v1060 = vpop.xlane.xlu0 %1059
  %1061 = vxpose.xlu0.b32.start [1/16] %v1060, 128
  %1062 = vxpose.xlu0.b32.cont [2/16] 0.0, 128
  %1063 = vxpose.xlu0.b32.cont [3/16] 0.0, 128
  %1064 = vxpose.xlu0.b32.cont [4/16] 0.0, 128
  %1065 = vxpose.xlu0.b32.cont [5/16] 0.0, 128
  %1066 = vxpose.xlu0.b32.cont [6/16] 0.0, 128
  %1067 = vxpose.xlu0.b32.cont [7/16] 0.0, 128
  %1068 = vxpose.xlu0.b32.cont [8/16] 0.0, 128
  %1069 = vxpose.xlu0.b32.cont [9/16] 0.0, 128
  %1070 = vxpose.xlu0.b32.cont [10/16] 0.0, 128
  %1071 = vxpose.xlu0.b32.cont [11/16] 0.0, 128
  %1072 = vxpose.xlu0.b32.cont [12/16] 0.0, 128
  %1073 = vxpose.xlu0.b32.cont [13/16] 0.0, 128
  %1074 = vxpose.xlu0.b32.cont [14/16] 0.0, 128
  %1075 = vxpose.xlu0.b32.cont [15/16] 0.0, 128
  %1076 = vxpose.xlu0.b32.end [16/16] 0.0, 128
  %v1077 = vpop.trf.xlu0
  %v1078 = vpop.trf.xlu0
  %v1079 = vpop.trf.xlu0
  %v1080 = vpop.trf.xlu0
  %v1081 = vpop.trf.xlu0
  %v1082 = vpop.trf.xlu0
  %v1083 = vpop.trf.xlu0
  %v1084 = vpop.trf.xlu0
  %v1085 = vpop.trf.xlu0
  %v1086 = vpop.trf.xlu0
  %v1087 = vpop.trf.xlu0
  %v1088 = vpop.trf.xlu0
  %v1089 = vpop.trf.xlu0
  %v1090 = vpop.trf.xlu0
  %v1091 = vpop.trf.xlu0
  %v1092 = vpop.trf.xlu0
  %1093 = vst.msk [vmem:[#allocation3 + $0x5] sm:$0x1] %vm352, %v1077
  %1095 = vrot.lane.b32.xlu0 %v1052, 64
  %v1096 = vpop.permute.xlu0 %1095
  %v1097 = vsel %vm47, %v1096, 0
  %1099 = vmatprep.subr.mxu0 0.0
  %1100 = vmatpush1.msra.mxu0 %v186
  %1101 = vmatprep.subr.mxu0 0.0
  %1102 = vmatpush1.msra.mxu0 %v187
  %1103 = vmatprep.subr.mxu0 0.0
  %1104 = vmatpush1.msra.mxu0 %v188
  %1105 = vmatprep.subr.mxu0 0.0
  %1106 = vmatpush1.msra.mxu0 %v189
  %1107 = vmatprep.subr.mxu0 0.0
  %1108 = vmatpush1.msra.mxu0 0.0
  %1109 = vmatprep.subr.mxu0 0.0
  %1110 = vmatpush1.msra.mxu0 0.0
  %1111 = vmatprep.subr.mxu0 0.0
  %1112 = vmatpush1.msra.mxu0 0.0
  %1113 = vmatprep.subr.mxu0 0.0
  %1114 = vmatpush1.msra.mxu0 0.0
  %1115 = vmatprep.subr.mxu0 0.0
  %1116 = vmatpush1.msra.mxu0 0.0
  %1117 = vmatprep.subr.mxu0 0.0
  %1118 = vmatpush1.msra.mxu0 0.0
  %1119 = vmatprep.subr.mxu0 0.0
  %1120 = vmatpush1.msra.mxu0 0.0
  %1121 = vmatprep.subr.mxu0 0.0
  %1122 = vmatpush1.msra.mxu0 0.0
  %1123 = vmatprep.subr.mxu0 0.0
  %1124 = vmatpush1.msra.mxu0 0.0
  %1125 = vmatprep.subr.mxu0 0.0
  %1126 = vmatpush1.msra.mxu0 0.0
  %1127 = vmatprep.subr.mxu0 0.0
  %1128 = vmatpush1.msra.mxu0 0.0
  %1129 = vmatprep.subr.mxu0 0.0
  %1130 = vmatpush1.msra.mxu0 0.0
  %1131 = vmatprep.subr.mxu0 0.0
  %1132 = vmatpush1.msra.mxu0 0.0
  %1133 = vmatprep.subr.mxu0 0.0
  %1134 = vmatpush1.msra.mxu0 0.0
  %1135 = vmatprep.subr.mxu0 0.0
  %1136 = vmatpush1.msra.mxu0 0.0
  %1137 = vmatprep.subr.mxu0 0.0
  %1138 = vmatpush1.msra.mxu0 0.0
  %1139 = vmatprep.subr.mxu0 0.0
  %1140 = vmatpush1.msra.mxu0 0.0
  %1141 = vmatprep.subr.mxu0 0.0
  %1142 = vmatpush1.msra.mxu0 0.0
  %1143 = vmatprep.subr.mxu0 0.0
  %1144 = vmatpush1.msra.mxu0 0.0
  %1145 = vmatprep.subr.mxu0 0.0
  %1146 = vmatpush1.msra.mxu0 0.0
  %1147 = vmatprep.subr.mxu0 0.0
  %1148 = vmatpush1.msra.mxu0 0.0
  %1149 = vmatprep.subr.mxu0 0.0
  %1150 = vmatpush1.msra.mxu0 0.0
  %1151 = vmatprep.subr.mxu0 0.0
  %1152 = vmatpush1.msra.mxu0 0.0
  %1153 = vmatprep.subr.mxu0 0.0
  %1154 = vmatpush1.msra.mxu0 0.0
  %1155 = vmatprep.subr.mxu0 0.0
  %1156 = vmatpush1.msra.mxu0 0.0
  %1157 = vmatprep.subr.mxu0 0.0
  %1158 = vmatpush1.msra.mxu0 0.0
  %1159 = vmatprep.subr.mxu0 0.0
  %1160 = vmatpush1.msra.mxu0 0.0
  %1161 = vmatprep.subr.mxu0 0.0
  %1162 = vmatpush1.msra.mxu0 0.0
  %1163 = vmatprep.mubr.f32.mxu0 0.0
  %1164 = vmatmul.mubr.f32.gmra.mrb[0].mxu0 %v1097
  %v1165 = vpop.f32.mrb[0].mxu0
  %v1166 = vadd.f32 0.0, %v1165
  %v1167 = vpop.f32.mrb[0].mxu0
  %1168 = vdwg.mxu0
  %s1169 = scalar_lea.vmem [#allocation2], 48
  %v1170 = vld [vmem:[%s1169] sm:$0xff]
  %v1171 = vadd.f32 %v1170, %v1166
  %v1172 = vxor.u32 %v1171, 2147483648
  %v1173 = vmul.f32 %v1172, 1.442695
  %v1174 = vpow.pop %v1173
  %v1175 = vadd.f32 %v1174, 1.0
  %v1176 = vrcp.pop %v1175
  %v1177 = vmul.f32 1.0, %v1176
  %v1178 = vadd.f32 %v1166, %v284
  %1180 = vrot.lane.b32.xlu0 %v1178, 64
  %v1181 = vpop.permute.xlu0 %1180
  %v1183 = vmul.f32 %v1177, %v1181
  %1185 = vrot.lane.b32.xlu0 %v1183, 64
  %v1186 = vpop.permute.xlu0 %1185
  %v1188 = vadd.f32 %v1170, %v1186
  %v1189 = vtanh.pop %v1188
  %v1190 = vsub.f32 %v1052, %v1189
  %1192 = vrot.lane.b32.xlu0 %v1190, 96
  %v1193 = vpop.permute.xlu0 %1192
  %v1195 = vmul.f32 %v1177, %v1193
  %1197 = vrot.lane.b32.xlu0 %v1195, 32
  %v1198 = vpop.permute.xlu0 %1197
  %v1200 = vadd.f32 %v1189, %v1198
  %v1201 = vmul.f32 %v1200, %v310
  %1203 = vrot.lane.b32.xlu0 %v1201, 64
  %v1204 = vpop.permute.xlu0 %1203
  %v1206 = vsel %vm47, %v1204, 0.0
  %1207 = vadd.xlane.f32.xlu0 %v1206
  %v1208 = vpop.xlane.xlu0 %1207
  %1209 = vxpose.xlu0.b32.start [1/16] %v1208, 128
  %1210 = vxpose.xlu0.b32.cont [2/16] 0.0, 128
  %1211 = vxpose.xlu0.b32.cont [3/16] 0.0, 128
  %1212 = vxpose.xlu0.b32.cont [4/16] 0.0, 128
  %1213 = vxpose.xlu0.b32.cont [5/16] 0.0, 128
  %1214 = vxpose.xlu0.b32.cont [6/16] 0.0, 128
  %1215 = vxpose.xlu0.b32.cont [7/16] 0.0, 128
  %1216 = vxpose.xlu0.b32.cont [8/16] 0.0, 128
  %1217 = vxpose.xlu0.b32.cont [9/16] 0.0, 128
  %1218 = vxpose.xlu0.b32.cont [10/16] 0.0, 128
  %1219 = vxpose.xlu0.b32.cont [11/16] 0.0, 128
  %1220 = vxpose.xlu0.b32.cont [12/16] 0.0, 128
  %1221 = vxpose.xlu0.b32.cont [13/16] 0.0, 128
  %1222 = vxpose.xlu0.b32.cont [14/16] 0.0, 128
  %1223 = vxpose.xlu0.b32.cont [15/16] 0.0, 128
  %1224 = vxpose.xlu0.b32.end [16/16] 0.0, 128
  %v1225 = vpop.trf.xlu0
  %v1226 = vpop.trf.xlu0
  %v1227 = vpop.trf.xlu0
  %v1228 = vpop.trf.xlu0
  %v1229 = vpop.trf.xlu0
  %v1230 = vpop.trf.xlu0
  %v1231 = vpop.trf.xlu0
  %v1232 = vpop.trf.xlu0
  %v1233 = vpop.trf.xlu0
  %v1234 = vpop.trf.xlu0
  %v1235 = vpop.trf.xlu0
  %v1236 = vpop.trf.xlu0
  %v1237 = vpop.trf.xlu0
  %v1238 = vpop.trf.xlu0
  %v1239 = vpop.trf.xlu0
  %v1240 = vpop.trf.xlu0
  %1241 = vst.msk [vmem:[#allocation3 + $0x6] sm:$0x1] %vm352, %v1225
  %1243 = vrot.lane.b32.xlu0 %v1200, 64
  %v1244 = vpop.permute.xlu0 %1243
  %v1245 = vsel %vm47, %v1244, 0
  %1247 = vmatprep.subr.mxu0 0.0
  %1248 = vmatpush1.msra.mxu0 %v186
  %1249 = vmatprep.subr.mxu0 0.0
  %1250 = vmatpush1.msra.mxu0 %v187
  %1251 = vmatprep.subr.mxu0 0.0
  %1252 = vmatpush1.msra.mxu0 %v188
  %1253 = vmatprep.subr.mxu0 0.0
  %1254 = vmatpush1.msra.mxu0 %v189
  %1255 = vmatprep.subr.mxu0 0.0
  %1256 = vmatpush1.msra.mxu0 0.0
  %1257 = vmatprep.subr.mxu0 0.0
  %1258 = vmatpush1.msra.mxu0 0.0
  %1259 = vmatprep.subr.mxu0 0.0
  %1260 = vmatpush1.msra.mxu0 0.0
  %1261 = vmatprep.subr.mxu0 0.0
  %1262 = vmatpush1.msra.mxu0 0.0
  %1263 = vmatprep.subr.mxu0 0.0
  %1264 = vmatpush1.msra.mxu0 0.0
  %1265 = vmatprep.subr.mxu0 0.0
  %1266 = vmatpush1.msra.mxu0 0.0
  %1267 = vmatprep.subr.mxu0 0.0
  %1268 = vmatpush1.msra.mxu0 0.0
  %1269 = vmatprep.subr.mxu0 0.0
  %1270 = vmatpush1.msra.mxu0 0.0
  %1271 = vmatprep.subr.mxu0 0.0
  %1272 = vmatpush1.msra.mxu0 0.0
  %1273 = vmatprep.subr.mxu0 0.0
  %1274 = vmatpush1.msra.mxu0 0.0
  %1275 = vmatprep.subr.mxu0 0.0
  %1276 = vmatpush1.msra.mxu0 0.0
  %1277 = vmatprep.subr.mxu0 0.0
  %1278 = vmatpush1.msra.mxu0 0.0
  %1279 = vmatprep.subr.mxu0 0.0
  %1280 = vmatpush1.msra.mxu0 0.0
  %1281 = vmatprep.subr.mxu0 0.0
  %1282 = vmatpush1.msra.mxu0 0.0
  %1283 = vmatprep.subr.mxu0 0.0
  %1284 = vmatpush1.msra.mxu0 0.0
  %1285 = vmatprep.subr.mxu0 0.0
  %1286 = vmatpush1.msra.mxu0 0.0
  %1287 = vmatprep.subr.mxu0 0.0
  %1288 = vmatpush1.msra.mxu0 0.0
  %1289 = vmatprep.subr.mxu0 0.0
  %1290 = vmatpush1.msra.mxu0 0.0
  %1291 = vmatprep.subr.mxu0 0.0
  %1292 = vmatpush1.msra.mxu0 0.0
  %1293 = vmatprep.subr.mxu0 0.0
  %1294 = vmatpush1.msra.mxu0 0.0
  %1295 = vmatprep.subr.mxu0 0.0
  %1296 = vmatpush1.msra.mxu0 0.0
  %1297 = vmatprep.subr.mxu0 0.0
  %1298 = vmatpush1.msra.mxu0 0.0
  %1299 = vmatprep.subr.mxu0 0.0
  %1300 = vmatpush1.msra.mxu0 0.0
  %1301 = vmatprep.subr.mxu0 0.0
  %1302 = vmatpush1.msra.mxu0 0.0
  %1303 = vmatprep.subr.mxu0 0.0
  %1304 = vmatpush1.msra.mxu0 0.0
  %1305 = vmatprep.subr.mxu0 0.0
  %1306 = vmatpush1.msra.mxu0 0.0
  %1307 = vmatprep.subr.mxu0 0.0
  %1308 = vmatpush1.msra.mxu0 0.0
  %1309 = vmatprep.subr.mxu0 0.0
  %1310 = vmatpush1.msra.mxu0 0.0
  %1311 = vmatprep.mubr.f32.mxu0 0.0
  %1312 = vmatmul.mubr.f32.gmra.mrb[0].mxu0 %v1245
  %v1313 = vpop.f32.mrb[0].mxu0
  %v1314 = vadd.f32 0.0, %v1313
  %v1315 = vpop.f32.mrb[0].mxu0
  %1316 = vdwg.mxu0
  %s1317 = scalar_lea.vmem [#allocation2], 56
  %v1318 = vld [vmem:[%s1317] sm:$0xff]
  %v1319 = vadd.f32 %v1318, %v1314
  %v1320 = vxor.u32 %v1319, 2147483648
  %v1321 = vmul.f32 %v1320, 1.442695
  %v1322 = vpow.pop %v1321
  %v1323 = vadd.f32 %v1322, 1.0
  %v1324 = vrcp.pop %v1323
  %v1325 = vmul.f32 1.0, %v1324
  %v1326 = vadd.f32 %v1314, %v284
  %1328 = vrot.lane.b32.xlu0 %v1326, 64
  %v1329 = vpop.permute.xlu0 %1328
  %v1331 = vmul.f32 %v1325, %v1329
  %1333 = vrot.lane.b32.xlu0 %v1331, 64
  %v1334 = vpop.permute.xlu0 %1333
  %v1336 = vadd.f32 %v1318, %v1334
  %v1337 = vtanh.pop %v1336
  %v1338 = vsub.f32 %v1200, %v1337
  %1340 = vrot.lane.b32.xlu0 %v1338, 96
  %v1341 = vpop.permute.xlu0 %1340
  %v1343 = vmul.f32 %v1325, %v1341
  %1345 = vrot.lane.b32.xlu0 %v1343, 32
  %v1346 = vpop.permute.xlu0 %1345
  %v1348 = vadd.f32 %v1337, %v1346
  %v1349 = vmul.f32 %v1348, %v310
  %1351 = vrot.lane.b32.xlu0 %v1349, 64
  %v1352 = vpop.permute.xlu0 %1351
  %v1354 = vsel %vm47, %v1352, 0.0
  %1355 = vadd.xlane.f32.xlu0 %v1354
  %v1356 = vpop.xlane.xlu0 %1355
  %1357 = vxpose.xlu0.b32.start [1/16] %v1356, 128
  %1358 = vxpose.xlu0.b32.cont [2/16] 0.0, 128
  %1359 = vxpose.xlu0.b32.cont [3/16] 0.0, 128
  %1360 = vxpose.xlu0.b32.cont [4/16] 0.0, 128
  %1361 = vxpose.xlu0.b32.cont [5/16] 0.0, 128
  %1362 = vxpose.xlu0.b32.cont [6/16] 0.0, 128
  %1363 = vxpose.xlu0.b32.cont [7/16] 0.0, 128
  %1364 = vxpose.xlu0.b32.cont [8/16] 0.0, 128
  %1365 = vxpose.xlu0.b32.cont [9/16] 0.0, 128
  %1366 = vxpose.xlu0.b32.cont [10/16] 0.0, 128
  %1367 = vxpose.xlu0.b32.cont [11/16] 0.0, 128
  %1368 = vxpose.xlu0.b32.cont [12/16] 0.0, 128
  %1369 = vxpose.xlu0.b32.cont [13/16] 0.0, 128
  %1370 = vxpose.xlu0.b32.cont [14/16] 0.0, 128
  %1371 = vxpose.xlu0.b32.cont [15/16] 0.0, 128
  %1372 = vxpose.xlu0.b32.end [16/16] 0.0, 128
  %v1373 = vpop.trf.xlu0
  %v1374 = vpop.trf.xlu0
  %v1375 = vpop.trf.xlu0
  %v1376 = vpop.trf.xlu0
  %v1377 = vpop.trf.xlu0
  %v1378 = vpop.trf.xlu0
  %v1379 = vpop.trf.xlu0
  %v1380 = vpop.trf.xlu0
  %v1381 = vpop.trf.xlu0
  %v1382 = vpop.trf.xlu0
  %v1383 = vpop.trf.xlu0
  %v1384 = vpop.trf.xlu0
  %v1385 = vpop.trf.xlu0
  %v1386 = vpop.trf.xlu0
  %v1387 = vpop.trf.xlu0
  %v1388 = vpop.trf.xlu0
  %1389 = vst.msk [vmem:[#allocation3 + $0x7] sm:$0x1] %vm352, %v1373
  %v1390 = vld [vmem:[#allocation3] sm:$0xff]
  %1391 = vxpose.xlu0.b32.start [1/16] %v1390, 128
  %1392 = vxpose.xlu0.b32.cont [2/16] 0.0, 128
  %1393 = vxpose.xlu0.b32.cont [3/16] 0.0, 128
  %1394 = vxpose.xlu0.b32.cont [4/16] 0.0, 128
  %1395 = vxpose.xlu0.b32.cont [5/16] 0.0, 128
  %1396 = vxpose.xlu0.b32.cont [6/16] 0.0, 128
  %1397 = vxpose.xlu0.b32.cont [7/16] 0.0, 128
  %1398 = vxpose.xlu0.b32.cont [8/16] 0.0, 128
  %1399 = vxpose.xlu0.b32.cont [9/16] 0.0, 128
  %1400 = vxpose.xlu0.b32.cont [10/16] 0.0, 128
  %1401 = vxpose.xlu0.b32.cont [11/16] 0.0, 128
  %1402 = vxpose.xlu0.b32.cont [12/16] 0.0, 128
  %1403 = vxpose.xlu0.b32.cont [13/16] 0.0, 128
  %1404 = vxpose.xlu0.b32.cont [14/16] 0.0, 128
  %1405 = vxpose.xlu0.b32.cont [15/16] 0.0, 128
  %1406 = vxpose.xlu0.b32.end [16/16] 0.0, 128
  %v1407 = vpop.trf.xlu0
  %v1408 = vpop.trf.xlu0
  %v1409 = vpop.trf.xlu0
  %v1410 = vpop.trf.xlu0
  %v1411 = vpop.trf.xlu0
  %v1412 = vpop.trf.xlu0
  %v1413 = vpop.trf.xlu0
  %v1414 = vpop.trf.xlu0
  %v1415 = vpop.trf.xlu0
  %v1416 = vpop.trf.xlu0
  %v1417 = vpop.trf.xlu0
  %v1418 = vpop.trf.xlu0
  %v1419 = vpop.trf.xlu0
  %v1420 = vpop.trf.xlu0
  %v1421 = vpop.trf.xlu0
  %v1422 = vpop.trf.xlu0
  %v1423 = vld [vmem:[#allocation4] sm:$0x1]
  %v1425 = vlaneseq
  %v1426 = vshrl.u32 %v1425, 7
  %v1427 = vsub.s32 0, %v1426
  %v1428 = vrot.slane %v1423, %v1427
  %1429 = vset.pattern.permute.xlu0 0
  %1430 = vperm.xlu0 %1429, %v1428
  %v1431 = vpop.permute.xlu0 %1430
  %v1433 = vadd.f32 %v1407, %v1431
  %v1434 = vxor.u32 %v1433, 2147483648
  %v1435 = vmul.f32 %v1434, 1.442695
  %v1436 = vpow.pop %v1435
  %v1437 = vadd.f32 %v1436, 1.0
  %v1438 = vrcp.pop %v1437
  %v1439 = vmul.f32 1.0, %v1438
  %vm1440 = vcmask 64512
  %1441 = vst.msk [vmem:[%s7] sm:$0xff] %vm1440, %v1439
  // Predicated region
  $region30: #{dl_model_forward.1} parent=0 // pred_check
    _
  $region31: #{dl_model_forward.1} parent=0 // pred_check_branch
    %1443 = sbr.rel (0) target = $region33
  $region32: #{dl_model_forward.1} parent=0 // pred_region
    _
  $region33: #{dl_model_forward.1} parent=0 // pred_fallthru
    _
  // Predicated region
  $region34: #{dl_model_forward.1} parent=0 // pred_check
    _
  $region35: #{dl_model_forward.1} parent=0 // pred_check_branch
    %1445 = sbr.rel (0) target = $region37
  $region36: #{dl_model_forward.1} parent=0 // pred_region
    _
  $region37: #{dl_model_forward.1} parent=0 // pred_fallthru
    _

</llo_original>
